<compile_context>
chip_gen: v7x
topology: tpu7x:2x2x1
jax: 0.10.0
libtpu: 0.0.40
codegen_flags: <defaults>
</compile_context>

<pallas_src>
import jax
import jax.numpy as jnp
from jax.experimental import pallas as pl
from jax.experimental.pallas import tpu as pltpu


def _bahdanau_kernel(ctx_ref, dec_ref, we_ref, be_ref, wd_ref, bd_ref, v_ref,
                     bv_ref, ct_ref, w_ref):
    # ctx_ref: (Bt, S, 2H)   dec_ref: (Bt, H)
    # we_ref:  (2H, H)       be_ref:  (1, H)
    # wd_ref:  (H, H)        bd_ref:  (1, H)
    # v_ref:   (1, H)        bv_ref:  (1,)  [SMEM scalar]
    # ct_ref:  (Bt, 2H)      w_ref:   (Bt, S)
    Bt, S, H2 = ctx_ref.shape
    H = wd_ref.shape[0]

    ctx = ctx_ref[...]                                                    # (Bt, S, 2H)

    # --- projections: big MXU matmuls with f32 accumulation -------------------
    gamma_e = jnp.dot(ctx.reshape(Bt * S, H2), we_ref[...],
                      preferred_element_type=jnp.float32) + be_ref[...]   # (Bt*S, H)
    gamma_d = jnp.dot(dec_ref[...], wd_ref[...],
                      preferred_element_type=jnp.float32) + bd_ref[...]   # (Bt, H)

    # --- additive attention energies ------------------------------------------
    t = jnp.tanh(gamma_e.reshape(Bt, S, H) + gamma_d[:, None, :])         # (Bt, S, H)

    # --- scores, lane-dense (Bt, S): batched (1,H)x(S,H)^T on the MXU ---------
    v_b = jnp.broadcast_to(v_ref[...][None], (Bt, 1, H))                  # (Bt, 1, H)
    scores = jnp.einsum("bqh,bsh->bqs", v_b, t,
                        preferred_element_type=jnp.float32)[:, 0, :]      # (Bt, S)
    scores = scores + bv_ref[0]

    # --- softmax over S (lane axis), f32 ---------------------------------------
    m = jnp.max(scores, axis=-1, keepdims=True)                           # (Bt, 1)
    e = jnp.exp(scores - m)                                               # (Bt, S)
    w = e / jnp.sum(e, axis=-1, keepdims=True)                            # (Bt, S)

    # --- weighted context on the MXU: (Bt,1,S) @ (Bt,S,2H) ---------------------
    c = jnp.einsum("bqs,bsd->bqd", w[:, None, :], ctx,
                   preferred_element_type=jnp.float32)                    # (Bt, 1, 2H)

    ct_ref[...] = c[:, 0, :].astype(ct_ref.dtype)                         # (Bt, 2H)
    w_ref[...] = w.astype(w_ref.dtype)                                    # (Bt, S)


def bahdanau_attention_pallas(context, dec_hidden, params, *, block_b=None):
    """context: (B, S, 2H) f32, dec_hidden: (B, H) f32.

    params dict (weights stored (in, out); v in PyTorch's native (1, H) layout):
      we (2H, H), be (1, H), wd (H, H), bd (1, H), v (1, H), bv (1,)
    Returns (c_t (B, 2H), weights (B, S)).
    """
    B, S, H2 = context.shape
    H = dec_hidden.shape[1]
    assert H2 == 2 * H

    if block_b is None:
        # Keep the batch block sublane-aligned (multiple of 8) when possible.
        block_b = 8 if B % 8 == 0 else B
    assert B % block_b == 0, "batch must divide evenly into batch blocks"
    grid = (B // block_b,)

    we, be, wd, bd, v, bv = (params[k] for k in ("we", "be", "wd", "bd", "v", "bv"))

    grid_spec = pltpu.PrefetchScalarGridSpec(
        num_scalar_prefetch=0,
        grid=grid,
        in_specs=[
            pl.BlockSpec((block_b, S, H2), lambda b: (b, 0, 0)),   # context block
            pl.BlockSpec((block_b, H), lambda b: (b, 0)),          # dec_hidden block
            pl.BlockSpec((H2, H), lambda b: (0, 0)),               # W_enc (constant)
            pl.BlockSpec((1, H), lambda b: (0, 0)),                # b_enc
            pl.BlockSpec((H, H), lambda b: (0, 0)),                # W_dec
            pl.BlockSpec((1, H), lambda b: (0, 0)),                # b_dec
            pl.BlockSpec((1, H), lambda b: (0, 0)),                # v row
            pl.BlockSpec(memory_space=pltpu.MemorySpace.SMEM),     # b_v scalar
        ],
        out_specs=[
            pl.BlockSpec((block_b, H2), lambda b: (b, 0)),         # c_t
            pl.BlockSpec((block_b, S), lambda b: (b, 0)),          # weights
        ],
    )

    return pl.pallas_call(
        _bahdanau_kernel,
        out_shape=(
            jax.ShapeDtypeStruct((B, H2), jnp.float32),
            jax.ShapeDtypeStruct((B, S), jnp.float32),
        ),
        grid_spec=grid_spec,
        compiler_params=pltpu.CompilerParams(
            dimension_semantics=("parallel",)),
    )(context, dec_hidden, we, be, wd, bd, v, bv)


def bahdanau_attention_ref(context, dec_hidden, params):
    """Pure-JAX reference mirroring the PyTorch forward."""
    ge = context @ params["we"] + params["be"][0]                         # (B, S, H)
    gd = (dec_hidden @ params["wd"] + params["bd"][0])[:, None, :]        # (B, 1, H)
    scores = jnp.einsum("bsh,h->bs", jnp.tanh(ge + gd), params["v"][0]) + params["bv"][0]
    weights = jax.nn.softmax(scores, axis=1)
    c_t = jnp.einsum("bs,bsd->bd", weights, context)
    return c_t, weights


if __name__ == "__main__":
    # Small but sublane-friendly shapes: B=16 with Bt=8 gives 2 parallel grid
    # steps and a (Bt*S, 2H) = (128, 64) encoder matmul.
    B, S, H = 16, 16, 32
    key = jax.random.PRNGKey(0)
    k_ctx, k_dec, k_we, k_be, k_wd, k_bd, k_v, k_bv = jax.random.split(key, 8)

    context = jax.random.normal(k_ctx, (B, S, 2 * H), dtype=jnp.float32)
    dec_hidden = jax.random.normal(k_dec, (B, H), dtype=jnp.float32)

    params = {
        "we": jax.random.normal(k_we, (2 * H, H), dtype=jnp.float32) * 0.1,
        "be": jax.random.normal(k_be, (1, H), dtype=jnp.float32) * 0.1,
        "wd": jax.random.normal(k_wd, (H, H), dtype=jnp.float32) * 0.1,
        "bd": jax.random.normal(k_bd, (1, H), dtype=jnp.float32) * 0.1,
        "v": jax.random.normal(k_v, (1, H), dtype=jnp.float32) * 0.1,
        "bv": jax.random.normal(k_bv, (1,), dtype=jnp.float32) * 0.1,
    }

    c_t, weights = bahdanau_attention_pallas(context, dec_hidden, params, block_b=8)
    jax.block_until_ready((c_t, weights))

    c_t_ref, weights_ref = bahdanau_attention_ref(context, dec_hidden, params)
    assert jnp.allclose(c_t, c_t_ref, atol=1e-5, rtol=1e-5)
    assert jnp.allclose(weights, weights_ref, atol=1e-5, rtol=1e-5)

    print("KERNEL_OK")
</pallas_src>

<mosaic_0001>
module attributes {stable_mosaic.version = 11 : i64} {
  func.func @_bahdanau_kernel(%arg0: i32, %arg1: memref<8x16x64xf32, #tpu.memory_space<vmem>>, %arg2: memref<8x32xf32, #tpu.memory_space<vmem>>, %arg3: memref<64x32xf32, #tpu.memory_space<vmem>>, %arg4: memref<1x32xf32, #tpu.memory_space<vmem>>, %arg5: memref<32x32xf32, #tpu.memory_space<vmem>>, %arg6: memref<1x32xf32, #tpu.memory_space<vmem>>, %arg7: memref<1x32xf32, #tpu.memory_space<vmem>>, %arg8: memref<1xf32, #tpu.memory_space<smem>>, %arg9: memref<8x64xf32, #tpu.memory_space<vmem>>, %arg10: memref<8x16xf32, #tpu.memory_space<vmem>>) attributes {dimension_semantics = [#tpu.dimension_semantics<parallel>], iteration_bounds = array<i64: 2>, scalar_prefetch = 0 : i64, scratch_operands = 0 : i64, tpu.core_type = #tpu.core_type<tc>, window_params = [{transform_indices = @transform_0, window_bounds = array<i64: 8, 16, 64>}, {transform_indices = @transform_1, window_bounds = array<i64: 8, 32>}, {pipeline_mode = #tpu.pipeline_mode<synchronous>, transform_indices = @transform_2, window_bounds = array<i64: 64, 32>}, {pipeline_mode = #tpu.pipeline_mode<synchronous>, transform_indices = @transform_3, window_bounds = array<i64: 1, 32>}, {pipeline_mode = #tpu.pipeline_mode<synchronous>, transform_indices = @transform_4, window_bounds = array<i64: 32, 32>}, {pipeline_mode = #tpu.pipeline_mode<synchronous>, transform_indices = @transform_5, window_bounds = array<i64: 1, 32>}, {pipeline_mode = #tpu.pipeline_mode<synchronous>, transform_indices = @transform_6, window_bounds = array<i64: 1, 32>}, {transform_indices = @transform_7, window_bounds = array<i64: 1>}, {transform_indices = @transform_8, window_bounds = array<i64: 8, 64>}, {transform_indices = @transform_9, window_bounds = array<i64: 8, 16>}]} {
    %c0 = arith.constant 0 : index
    %c0_0 = arith.constant 0 : index
    %c0_1 = arith.constant 0 : index
    %0 = vector.load %arg1[%c0, %c0_0, %c0_1] : memref<8x16x64xf32, #tpu.memory_space<vmem>>, vector<8x16x64xf32>
    %1 = vector.shape_cast %0 : vector<8x16x64xf32> to vector<128x64xf32>
    %c0_2 = arith.constant 0 : index
    %c0_3 = arith.constant 0 : index
    %2 = vector.load %arg3[%c0_2, %c0_3] : memref<64x32xf32, #tpu.memory_space<vmem>>, vector<64x32xf32>
    %cst = arith.constant dense<0.000000e+00> : vector<128x32xf32>
    %3 = tpu.matmul %1, %2, %cst {dimension_numbers = #tpu.dot_dimension_numbers<[1], [0], [0], [1], [0, 0, 1, 1], [], []>} : vector<128x64xf32>, vector<64x32xf32>, vector<128x32xf32> -> vector<128x32xf32>
    %c0_4 = arith.constant 0 : index
    %c0_5 = arith.constant 0 : index
    %4 = vector.load %arg4[%c0_4, %c0_5] : memref<1x32xf32, #tpu.memory_space<vmem>>, vector<1x32xf32>
    %5 = vector.broadcast %4 : vector<1x32xf32> to vector<128x32xf32>
    %6 = arith.addf %3, %5 : vector<128x32xf32>
    %c0_6 = arith.constant 0 : index
    %c0_7 = arith.constant 0 : index
    %7 = vector.load %arg2[%c0_6, %c0_7] : memref<8x32xf32, #tpu.memory_space<vmem>>, vector<8x32xf32>
    %c0_8 = arith.constant 0 : index
    %c0_9 = arith.constant 0 : index
    %8 = vector.load %arg5[%c0_8, %c0_9] : memref<32x32xf32, #tpu.memory_space<vmem>>, vector<32x32xf32>
    %cst_10 = arith.constant dense<0.000000e+00> : vector<8x32xf32>
    %9 = tpu.matmul %7, %8, %cst_10 {dimension_numbers = #tpu.dot_dimension_numbers<[1], [0], [0], [1], [0, 0, 1, 1], [], []>} : vector<8x32xf32>, vector<32x32xf32>, vector<8x32xf32> -> vector<8x32xf32>
    %c0_11 = arith.constant 0 : index
    %c0_12 = arith.constant 0 : index
    %10 = vector.load %arg6[%c0_11, %c0_12] : memref<1x32xf32, #tpu.memory_space<vmem>>, vector<1x32xf32>
    %11 = vector.broadcast %10 : vector<1x32xf32> to vector<8x32xf32>
    %12 = arith.addf %9, %11 : vector<8x32xf32>
    %13 = vector.shape_cast %6 : vector<128x32xf32> to vector<8x16x32xf32>
    %14 = vector.shape_cast %12 : vector<8x32xf32> to vector<8x1x32xf32>
    %15 = vector.broadcast %14 : vector<8x1x32xf32> to vector<8x16x32xf32>
    %16 = arith.addf %13, %15 : vector<8x16x32xf32>
    %17 = math.tanh %16 : vector<8x16x32xf32>
    %c0_13 = arith.constant 0 : index
    %c0_14 = arith.constant 0 : index
    %18 = vector.load %arg7[%c0_13, %c0_14] : memref<1x32xf32, #tpu.memory_space<vmem>>, vector<1x32xf32>
    %19 = vector.shape_cast %18 : vector<1x32xf32> to vector<1x1x32xf32>
    %20 = vector.shape_cast %19 : vector<1x1x32xf32> to vector<1x1x32xf32>
    %21 = vector.broadcast %20 : vector<1x1x32xf32> to vector<8x1x32xf32>
    "tpu.trace_start"() <{level = 10 : i32, message = "bqh,bsh->bqs"}> : () -> ()
    %cst_15 = arith.constant dense<0.000000e+00> : vector<8x1x16xf32>
    %22 = tpu.matmul %21, %17, %cst_15 {dimension_numbers = #tpu.dot_dimension_numbers<[2], [2], [1], [1], [0, 0, 0, 1, 1, 1], [0], [0]>} : vector<8x1x32xf32>, vector<8x16x32xf32>, vector<8x1x16xf32> -> vector<8x1x16xf32>
    "tpu.trace_stop"() : () -> ()
    %23 = vector.shape_cast %22 : vector<8x1x16xf32> to vector<8x16xf32>
    %c0_16 = arith.constant 0 : index
    %24 = memref.load %arg8[%c0_16] : memref<1xf32, #tpu.memory_space<smem>>
    %25 = vector.broadcast %24 : f32 to vector<8x16xf32>
    %26 = arith.addf %23, %25 : vector<8x16xf32>
    %cst_17 = arith.constant dense<0xFF800000> : vector<8xf32>
    %27 = vector.multi_reduction <maximumf>, %26, %cst_17 [1] : vector<8x16xf32> to vector<8xf32>
    %28 = vector.shape_cast %27 : vector<8xf32> to vector<8x1xf32>
    %29 = vector.broadcast %28 : vector<8x1xf32> to vector<8x16xf32>
    %30 = arith.subf %26, %29 : vector<8x16xf32>
    %31 = math.exp %30 : vector<8x16xf32>
    %cst_18 = arith.constant dense<0.000000e+00> : vector<8xf32>
    %32 = vector.multi_reduction <add>, %31, %cst_18 [1] : vector<8x16xf32> to vector<8xf32>
    %33 = vector.shape_cast %32 : vector<8xf32> to vector<8x1xf32>
    %34 = vector.broadcast %33 : vector<8x1xf32> to vector<8x16xf32>
    %35 = arith.divf %31, %34 : vector<8x16xf32>
    %36 = vector.shape_cast %35 : vector<8x16xf32> to vector<8x1x16xf32>
    "tpu.trace_start"() <{level = 10 : i32, message = "bqs,bsd->bqd"}> : () -> ()
    %cst_19 = arith.constant dense<0.000000e+00> : vector<8x1x64xf32>
    %37 = tpu.matmul %36, %0, %cst_19 {dimension_numbers = #tpu.dot_dimension_numbers<[2], [1], [1], [2], [0, 0, 0, 1, 1, 2], [0], [0]>} : vector<8x1x16xf32>, vector<8x16x64xf32>, vector<8x1x64xf32> -> vector<8x1x64xf32>
    "tpu.trace_stop"() : () -> ()
    %38 = vector.shape_cast %37 : vector<8x1x64xf32> to vector<8x64xf32>
    %c0_20 = arith.constant 0 : index
    %c0_21 = arith.constant 0 : index
    %39 = vector.load %arg9[%c0_20, %c0_21] : memref<8x64xf32, #tpu.memory_space<vmem>>, vector<8x64xf32>
    tpu.vector_store %arg9[%c0_20, %c0_21], %38 {strides = array<i32>} : memref<8x64xf32, #tpu.memory_space<vmem>>, vector<8x64xf32>,
    %c0_22 = arith.constant 0 : index
    %c0_23 = arith.constant 0 : index
    %40 = vector.load %arg10[%c0_22, %c0_23] : memref<8x16xf32, #tpu.memory_space<vmem>>, vector<8x16xf32>
    tpu.vector_store %arg10[%c0_22, %c0_23], %35 {strides = array<i32>} : memref<8x16xf32, #tpu.memory_space<vmem>>, vector<8x16xf32>,
    return
  }
  func.func @transform_0(%arg0: i32) -> (i32, i32, i32) {
    %c0_i32 = arith.constant 0 : i32
    %c0_i32_0 = arith.constant 0 : i32
    %c0_i32_1 = arith.constant 0 : i32
    return %arg0, %c0_i32, %c0_i32_0 : i32, i32, i32
  }
  func.func @transform_1(%arg0: i32) -> (i32, i32) {
    %c0_i32 = arith.constant 0 : i32
    %c0_i32_0 = arith.constant 0 : i32
    return %arg0, %c0_i32 : i32, i32
  }
  func.func @transform_2(%arg0: i32) -> (i32, i32) {
    %c0_i32 = arith.constant 0 : i32
    %c0_i32_0 = arith.constant 0 : i32
    %c0_i32_1 = arith.constant 0 : i32
    return %c0_i32, %c0_i32_0 : i32, i32
  }
  func.func @transform_3(%arg0: i32) -> (i32, i32) {
    %c0_i32 = arith.constant 0 : i32
    %c0_i32_0 = arith.constant 0 : i32
    %c0_i32_1 = arith.constant 0 : i32
    return %c0_i32, %c0_i32_0 : i32, i32
  }
  func.func @transform_4(%arg0: i32) -> (i32, i32) {
    %c0_i32 = arith.constant 0 : i32
    %c0_i32_0 = arith.constant 0 : i32
    %c0_i32_1 = arith.constant 0 : i32
    return %c0_i32, %c0_i32_0 : i32, i32
  }
  func.func @transform_5(%arg0: i32) -> (i32, i32) {
    %c0_i32 = arith.constant 0 : i32
    %c0_i32_0 = arith.constant 0 : i32
    %c0_i32_1 = arith.constant 0 : i32
    return %c0_i32, %c0_i32_0 : i32, i32
  }
  func.func @transform_6(%arg0: i32) -> (i32, i32) {
    %c0_i32 = arith.constant 0 : i32
    %c0_i32_0 = arith.constant 0 : i32
    %c0_i32_1 = arith.constant 0 : i32
    return %c0_i32, %c0_i32_0 : i32, i32
  }
  func.func @transform_7(%arg0: i32) -> i32 {
    %c0_i32 = arith.constant 0 : i32
    %c0_i32_0 = arith.constant 0 : i32
    return %c0_i32 : i32
  }
  func.func @transform_8(%arg0: i32) -> (i32, i32) {
    %c0_i32 = arith.constant 0 : i32
    %c0_i32_0 = arith.constant 0 : i32
    return %arg0, %c0_i32 : i32, i32
  }
  func.func @transform_9(%arg0: i32) -> (i32, i32) {
    %c0_i32 = arith.constant 0 : i32
    %c0_i32_0 = arith.constant 0 : i32
    return %arg0, %c0_i32 : i32, i32
  }
}

</mosaic_0001>

<llo_original>
// kernel: tpu_custom_call.1
$region0: #{tpu_custom_call.1}
  #allocation0 [shape = 'u32[]', space=smem, size = 0x4, offset = 0x4, fixed_abs, tag = 'smem constant byte address 0x4 - core index']
  #allocation1 [shape = 'u32[144,128]{1,0:T(1,128)}', space=vmem, size = 0x12000, scoped, tag = 'internal scratch']
  #allocation2 [shape = 'f32[1]{0:T(128)S(6)}', space=smem, size = 0x200, scoped, tag = 'scoped memory for tpu_custom_call.1']
  %s0 = inlined_call_operand.hbm [shape: f32[16,16,64], index: 0, kind: input, shape index: {}]
  %s1 = inlined_call_operand.vmem [shape: f32[16,32], index: 1, kind: input, shape index: {}]
  %s2 = inlined_call_operand.vmem [shape: f32[64,32], index: 2, kind: input, shape index: {}]
  %s3 = inlined_call_operand.vmem [shape: f32[1,32], index: 3, kind: input, shape index: {}]
  %s4 = inlined_call_operand.vmem [shape: f32[32,32], index: 4, kind: input, shape index: {}]
  %s5 = inlined_call_operand.vmem [shape: f32[1,32], index: 5, kind: input, shape index: {}]
  %s6 = inlined_call_operand.vmem [shape: f32[1,32], index: 6, kind: input, shape index: {}]
  %s7 = inlined_call_operand.<no memory space> [shape: f32[1], index: 7, kind: input, shape index: {}]
  %s8 = inlined_call_operand.hbm [shape: f32[16,64], index: 8, kind: output, shape index: {0}]
  %s9 = inlined_call_operand.hbm [shape: f32[16,16], index: 9, kind: output, shape index: {1}]
  %10 = xla_tuple %s8, %s9
  %s11 = sld [smem:[#allocation0]]
  $region77: #{tpu_custom_call.1} parent=0
    _
  %s13 = ssub.s32 1, %s11
  %s14 = scalar_select 0, %s13, %s11
  %15 = sst [smem:[#allocation2]] %s7
  $region1: #{tpu_custom_call.1} parent=0
    #allocation3 [shape = 'u8[131072]{0}', space=vmem, size = 0x20000, scoped, tag = 'input window, operand 0']
    #allocation4 [shape = 's32[2]{0}', space=sflag, size = 0x8, scoped, tag = 'scoped memory for tpu_custom_call.1']
    #allocation5 [shape = 's32[2]{0}', space=sflag, size = 0x8, scoped, tag = 'scoped memory for tpu_custom_call.1']
    #allocation6 [shape = 'u8[8192]{0}', space=vmem, size = 0x2000, scoped, tag = 'output window, operand 0']
    #allocation7 [shape = 'u8[8192]{0}', space=vmem, size = 0x2000, scoped, tag = 'output window, operand 1']
    #allocation8 [shape = 's32[2]{0}', space=sflag, size = 0x8, scoped, tag = 'scoped memory for tpu_custom_call.1']
    %16 = vsyncpa [#allocation4], 0
    %s17 = scalar_lea.sflag [#allocation4], 1
    %18 = vsyncpa %s17, 0
    %19 = vsyncpa [#allocation5], 0
    %s20 = scalar_lea.sflag [#allocation5], 1
    %21 = vsyncpa %s20, 0
    %22 = vsyncpa [#allocation8], 0
    %s23 = scalar_lea.sflag [#allocation8], 1
    %24 = vsyncpa %s23, 0
    loop: start=0, step=1, limit=4
    $region2: #{tpu_custom_call.1} parent=1 // loop_pre_header
      _
    $region3: #{tpu_custom_call.1} parent=1 // loop_header
      %s26 = sphi 0, %s30
      %p27 = scmp.ge.s32.totalorder %s26, 4
      %s36 = sphi 0, %s38
      %s39 = sphi 0, %s36
      %s40 = sphi 0, %s39
      %s56 = sphi 0, %s40
      %s62 = sphi 0, %s64
      %s65 = sphi 0, %s62
      %s66 = sphi 0, %s65
      %s82 = sphi 0, %s66
      %s86 = sphi 0, %s86
      %s88 = sphi 0, %s86
      %s89 = sphi 0, %s88
      %s103 = sphi 0, %s89
      %s107 = sphi 0, %s107
      %s109 = sphi 0, %s107
      %s110 = sphi 0, %s109
      %s124 = sphi 0, %s110
      %s128 = sphi 0, %s128
      %s130 = sphi 0, %s128
      %s131 = sphi 0, %s130
      %s145 = sphi 0, %s131
      %s149 = sphi 0, %s149
      %s151 = sphi 0, %s149
      %s152 = sphi 0, %s151
      %s166 = sphi 0, %s152
      %s170 = sphi 0, %s170
      %s172 = sphi 0, %s170
      %s173 = sphi 0, %s172
      %s187 = sphi 0, %s173
      %s191 = sphi 0, %s191
      %s193 = sphi 0, %s191
      %s194 = sphi 0, %s193
      %s208 = sphi 0, %s194
      %s214 = sphi 0, %s216
      %s217 = sphi 0, %s214
      %s218 = sphi 0, %s217
      %s234 = sphi 0, %s218
      %s240 = sphi 0, %s242
      %s243 = sphi 0, %s240
      %s244 = sphi 0, %s243
      %s260 = sphi 0, %s244
    $region4: #{tpu_custom_call.1} parent=1 // loop_header_branch
      %29 = sbr.rel (%p27) target = $region8
    $region5: #{tpu_custom_call.1} parent=1 // loop_body
      %s31 = ssub.s32 %s26, 1
      %s32 = ssub.s32 %s26, 2
      %s33 = sadd.s32 %s26, 1
      %s34 = ssub.s32 %s26, %s33
      %p35 = scmp.eq.s32.totalorder %s34, 0
      %s37 = sadd.s32 %s36, 1
      %s38 = scalar_select %p35, %s36, %s37
      %p41 = pneg %p35
      %p42 = scmp.eq.s32.totalorder %s26, 1
      %p43 = por %p41, %p42
      %p44 = scmp.ne.s32.totalorder %s36, %s39
      %p45 = scmp.eq.s32.totalorder %s26, 0
      %p46 = por %p44, %p45
      %p47 = scmp.ne.s32.totalorder %s36, %s39
      %p48 = scmp.eq.s32.totalorder %s31, 1
      %p49 = por %p47, %p48
      %p50 = scmp.ne.s32.totalorder %s39, %s40
      %p51 = scmp.eq.s32.totalorder %s31, 0
      %p52 = por %p50, %p51
      %p53 = scmp.ne.s32.totalorder %s39, %s40
      %p54 = scmp.eq.s32.totalorder %s32, 1
      %p55 = por %p53, %p54
      %p57 = scmp.ne.s32.totalorder %s40, %s56
      %p58 = scmp.eq.s32.totalorder %s32, 0
      %p59 = por %p57, %p58
      %s60 = ssub.s32 %s26, %s33
      %p61 = scmp.eq.s32.totalorder %s60, 0
      %s63 = sadd.s32 %s62, 1
      %s64 = scalar_select %p61, %s62, %s63
      %p67 = pneg %p61
      %p68 = scmp.eq.s32.totalorder %s26, 1
      %p69 = por %p67, %p68
      %p70 = scmp.ne.s32.totalorder %s62, %s65
      %p71 = scmp.eq.s32.totalorder %s26, 0
      %p72 = por %p70, %p71
      %p73 = scmp.ne.s32.totalorder %s62, %s65
      %p74 = scmp.eq.s32.totalorder %s31, 1
      %p75 = por %p73, %p74
      %p76 = scmp.ne.s32.totalorder %s65, %s66
      %p77 = scmp.eq.s32.totalorder %s31, 0
      %p78 = por %p76, %p77
      %p79 = scmp.ne.s32.totalorder %s65, %s66
      %p80 = scmp.eq.s32.totalorder %s32, 1
      %p81 = por %p79, %p80
      %p83 = scmp.ne.s32.totalorder %s66, %s82
      %p84 = scmp.eq.s32.totalorder %s32, 0
      %p85 = por %p83, %p84
      %s87 = sadd.s32 %s86, 1
      %p90 = scmp.eq.s32.totalorder %s26, 1
      %p91 = scmp.ne.s32.totalorder %s86, %s88
      %p92 = scmp.eq.s32.totalorder %s26, 0
      %p93 = por %p91, %p92
      %p94 = scmp.ne.s32.totalorder %s86, %s88
      %p95 = scmp.eq.s32.totalorder %s31, 1
      %p96 = por %p94, %p95
      %p97 = scmp.ne.s32.totalorder %s88, %s89
      %p98 = scmp.eq.s32.totalorder %s31, 0
      %p99 = por %p97, %p98
      %p100 = scmp.ne.s32.totalorder %s88, %s89
      %p101 = scmp.eq.s32.totalorder %s32, 1
      %p102 = por %p100, %p101
      %p104 = scmp.ne.s32.totalorder %s89, %s103
      %p105 = scmp.eq.s32.totalorder %s32, 0
      %p106 = por %p104, %p105
      %s108 = sadd.s32 %s107, 1
      %p111 = scmp.eq.s32.totalorder %s26, 1
      %p112 = scmp.ne.s32.totalorder %s107, %s109
      %p113 = scmp.eq.s32.totalorder %s26, 0
      %p114 = por %p112, %p113
      %p115 = scmp.ne.s32.totalorder %s107, %s109
      %p116 = scmp.eq.s32.totalorder %s31, 1
      %p117 = por %p115, %p116
      %p118 = scmp.ne.s32.totalorder %s109, %s110
      %p119 = scmp.eq.s32.totalorder %s31, 0
      %p120 = por %p118, %p119
      %p121 = scmp.ne.s32.totalorder %s109, %s110
      %p122 = scmp.eq.s32.totalorder %s32, 1
      %p123 = por %p121, %p122
      %p125 = scmp.ne.s32.totalorder %s110, %s124
      %p126 = scmp.eq.s32.totalorder %s32, 0
      %p127 = por %p125, %p126
      %s129 = sadd.s32 %s128, 1
      %p132 = scmp.eq.s32.totalorder %s26, 1
      %p133 = scmp.ne.s32.totalorder %s128, %s130
      %p134 = scmp.eq.s32.totalorder %s26, 0
      %p135 = por %p133, %p134
      %p136 = scmp.ne.s32.totalorder %s128, %s130
      %p137 = scmp.eq.s32.totalorder %s31, 1
      %p138 = por %p136, %p137
      %p139 = scmp.ne.s32.totalorder %s130, %s131
      %p140 = scmp.eq.s32.totalorder %s31, 0
      %p141 = por %p139, %p140
      %p142 = scmp.ne.s32.totalorder %s130, %s131
      %p143 = scmp.eq.s32.totalorder %s32, 1
      %p144 = por %p142, %p143
      %p146 = scmp.ne.s32.totalorder %s131, %s145
      %p147 = scmp.eq.s32.totalorder %s32, 0
      %p148 = por %p146, %p147
      %s150 = sadd.s32 %s149, 1
      %p153 = scmp.eq.s32.totalorder %s26, 1
      %p154 = scmp.ne.s32.totalorder %s149, %s151
      %p155 = scmp.eq.s32.totalorder %s26, 0
      %p156 = por %p154, %p155
      %p157 = scmp.ne.s32.totalorder %s149, %s151
      %p158 = scmp.eq.s32.totalorder %s31, 1
      %p159 = por %p157, %p158
      %p160 = scmp.ne.s32.totalorder %s151, %s152
      %p161 = scmp.eq.s32.totalorder %s31, 0
      %p162 = por %p160, %p161
      %p163 = scmp.ne.s32.totalorder %s151, %s152
      %p164 = scmp.eq.s32.totalorder %s32, 1
      %p165 = por %p163, %p164
      %p167 = scmp.ne.s32.totalorder %s152, %s166
      %p168 = scmp.eq.s32.totalorder %s32, 0
      %p169 = por %p167, %p168
      %s171 = sadd.s32 %s170, 1
      %p174 = scmp.eq.s32.totalorder %s26, 1
      %p175 = scmp.ne.s32.totalorder %s170, %s172
      %p176 = scmp.eq.s32.totalorder %s26, 0
      %p177 = por %p175, %p176
      %p178 = scmp.ne.s32.totalorder %s170, %s172
      %p179 = scmp.eq.s32.totalorder %s31, 1
      %p180 = por %p178, %p179
      %p181 = scmp.ne.s32.totalorder %s172, %s173
      %p182 = scmp.eq.s32.totalorder %s31, 0
      %p183 = por %p181, %p182
      %p184 = scmp.ne.s32.totalorder %s172, %s173
      %p185 = scmp.eq.s32.totalorder %s32, 1
      %p186 = por %p184, %p185
      %p188 = scmp.ne.s32.totalorder %s173, %s187
      %p189 = scmp.eq.s32.totalorder %s32, 0
      %p190 = por %p188, %p189
      %s192 = sadd.s32 %s191, 1
      %p195 = scmp.eq.s32.totalorder %s26, 1
      %p196 = scmp.ne.s32.totalorder %s191, %s193
      %p197 = scmp.eq.s32.totalorder %s26, 0
      %p198 = por %p196, %p197
      %p199 = scmp.ne.s32.totalorder %s191, %s193
      %p200 = scmp.eq.s32.totalorder %s31, 1
      %p201 = por %p199, %p200
      %p202 = scmp.ne.s32.totalorder %s193, %s194
      %p203 = scmp.eq.s32.totalorder %s31, 0
      %p204 = por %p202, %p203
      %p205 = scmp.ne.s32.totalorder %s193, %s194
      %p206 = scmp.eq.s32.totalorder %s32, 1
      %p207 = por %p205, %p206
      %p209 = scmp.ne.s32.totalorder %s194, %s208
      %p210 = scmp.eq.s32.totalorder %s32, 0
      %p211 = por %p209, %p210
      %s212 = ssub.s32 %s26, %s33
      %p213 = scmp.eq.s32.totalorder %s212, 0
      %s215 = sadd.s32 %s214, 1
      %s216 = scalar_select %p213, %s214, %s215
      %p219 = pneg %p213
      %p220 = scmp.eq.s32.totalorder %s26, 1
      %p221 = por %p219, %p220
      %p222 = scmp.ne.s32.totalorder %s214, %s217
      %p223 = scmp.eq.s32.totalorder %s26, 0
      %p224 = por %p222, %p223
      %p225 = scmp.ne.s32.totalorder %s214, %s217
      %p226 = scmp.eq.s32.totalorder %s31, 1
      %p227 = por %p225, %p226
      %p228 = scmp.ne.s32.totalorder %s217, %s218
      %p229 = scmp.eq.s32.totalorder %s31, 0
      %p230 = por %p228, %p229
      %p231 = scmp.ne.s32.totalorder %s217, %s218
      %p232 = scmp.eq.s32.totalorder %s32, 1
      %p233 = por %p231, %p232
      %p235 = scmp.ne.s32.totalorder %s218, %s234
      %p236 = scmp.eq.s32.totalorder %s32, 0
      %p237 = por %p235, %p236
      %s238 = ssub.s32 %s26, %s33
      %p239 = scmp.eq.s32.totalorder %s238, 0
      %s241 = sadd.s32 %s240, 1
      %s242 = scalar_select %p239, %s240, %s241
      %p245 = pneg %p239
      %p246 = scmp.eq.s32.totalorder %s26, 1
      %p247 = por %p245, %p246
      %p248 = scmp.ne.s32.totalorder %s240, %s243
      %p249 = scmp.eq.s32.totalorder %s26, 0
      %p250 = por %p248, %p249
      %p251 = scmp.ne.s32.totalorder %s240, %s243
      %p252 = scmp.eq.s32.totalorder %s31, 1
      %p253 = por %p251, %p252
      %p254 = scmp.ne.s32.totalorder %s243, %s244
      %p255 = scmp.eq.s32.totalorder %s31, 0
      %p256 = por %p254, %p255
      %p257 = scmp.ne.s32.totalorder %s243, %s244
      %p258 = scmp.eq.s32.totalorder %s32, 1
      %p259 = por %p257, %p258
      %p261 = scmp.ne.s32.totalorder %s244, %s260
      %p262 = scmp.eq.s32.totalorder %s32, 0
      %p263 = por %p261, %p262
      %p264 = scmp.le.s32.totalorder 1, %s26
      %p265 = scmp.lt.s32.totalorder %s26, 3
      %p266 = pnand %p264, %p265
      %p267 = pneg %p266
      // Predicated region
      $region9: #{tpu_custom_call.1} parent=5 // pred_check
        _
      $region10: #{tpu_custom_call.1} parent=5 // pred_check_branch
        %269 = sbr.rel (%p266) target = $region12
      $region11: #{tpu_custom_call.1} parent=5 // pred_region
        %s270 = ssub.s32 %s26, 1
        // Predicated region
        $region13: #{tpu_custom_call.1} parent=11 // pred_check
          %p271 = pneg %p99
        $region14: #{tpu_custom_call.1} parent=11 // pred_check_branch
          %273 = sbr.rel (%p271) target = $region16
        $region15: #{tpu_custom_call.1} parent=11 // pred_region
          _
        $region16: #{tpu_custom_call.1} parent=11 // pred_fallthru
          _
        // Predicated region
        $region17: #{tpu_custom_call.1} parent=11 // pred_check
          %p274 = pneg %p120
        $region18: #{tpu_custom_call.1} parent=11 // pred_check_branch
          %276 = sbr.rel (%p274) target = $region20
        $region19: #{tpu_custom_call.1} parent=11 // pred_region
          _
        $region20: #{tpu_custom_call.1} parent=11 // pred_fallthru
          _
        // Predicated region
        $region21: #{tpu_custom_call.1} parent=11 // pred_check
          %p277 = pneg %p141
        $region22: #{tpu_custom_call.1} parent=11 // pred_check_branch
          %279 = sbr.rel (%p277) target = $region24
        $region23: #{tpu_custom_call.1} parent=11 // pred_region
          _
        $region24: #{tpu_custom_call.1} parent=11 // pred_fallthru
          _
        // Predicated region
        $region25: #{tpu_custom_call.1} parent=11 // pred_check
          %p280 = pneg %p162
        $region26: #{tpu_custom_call.1} parent=11 // pred_check_branch
          %282 = sbr.rel (%p280) target = $region28
        $region27: #{tpu_custom_call.1} parent=11 // pred_region
          _
        $region28: #{tpu_custom_call.1} parent=11 // pred_fallthru
          _
        // Predicated region
        $region29: #{tpu_custom_call.1} parent=11 // pred_check
          %p283 = pneg %p183
        $region30: #{tpu_custom_call.1} parent=11 // pred_check_branch
          %285 = sbr.rel (%p283) target = $region32
        $region31: #{tpu_custom_call.1} parent=11 // pred_region
          _
        $region32: #{tpu_custom_call.1} parent=11 // pred_fallthru
          _
        // Predicated region
        $region33: #{tpu_custom_call.1} parent=11 // pred_check
          %p286 = pneg %p204
        $region34: #{tpu_custom_call.1} parent=11 // pred_check_branch
          %288 = sbr.rel (%p286) target = $region36
        $region35: #{tpu_custom_call.1} parent=11 // pred_region
          _
        $region36: #{tpu_custom_call.1} parent=11 // pred_fallthru
          _
      $region12: #{tpu_custom_call.1} parent=5 // pred_fallthru
        _
      %p289 = scmp.lt.s32.totalorder %s26, 2
      // Predicated region
      $region37: #{tpu_custom_call.1} parent=5 // pred_check
        %p290 = pneg %p289
      $region38: #{tpu_custom_call.1} parent=5 // pred_check_branch
        %292 = sbr.rel (%p290) target = $region40
      $region39: #{tpu_custom_call.1} parent=5 // pred_region
        // Predicated region
        $region41: #{tpu_custom_call.1} parent=39 // pred_check
          %p293 = pneg %p46
        $region42: #{tpu_custom_call.1} parent=39 // pred_check_branch
          %295 = sbr.rel (%p293) target = $region44
        $region43: #{tpu_custom_call.1} parent=39 // pred_region
          %s296 = sand.u32 %s36, 1
          %s297 = scalar_lea.sflag [#allocation4], %s296
          %s298 = sand.u32 %s36, 1
          %s299 = smul.addr %s298, 128
          %s300 = scalar_lea.vmem [#allocation3], %s299
          %s301 = smul.u32 8, %s26
          %s303 = ssub.s32 2048, 2048
          %304 = vsyncadd %s297, %s303
          %s305 = smul.addr %s301, 2
          %s306 = smul.addr %s305, 128
          %s307 = scalar_lea.hbm %s0, %s306
          %s308 = sshll.u32 %s300, 4
          %s309 = int_to_ptr.vmem [resolvable:$true] %s308
          %314 = dma.hbm_to_vmem [thread:$0]  %s307, 2048, %s309, %s297, 128, 128, 8
        $region44: #{tpu_custom_call.1} parent=39 // pred_fallthru
          _
        // Predicated region
        $region45: #{tpu_custom_call.1} parent=39 // pred_check
          %p315 = pneg %p72
        $region46: #{tpu_custom_call.1} parent=39 // pred_check_branch
          %317 = sbr.rel (%p315) target = $region48
        $region47: #{tpu_custom_call.1} parent=39 // pred_region
          %p318 = scmp.lt.s32.totalorder %s26, 1
          %s319 = scalar_select %p318, %s26, 1
          %s320 = smul.addr %s319, 8
          %s321 = scalar_lea.vmem %s1, %s320
        $region48: #{tpu_custom_call.1} parent=39 // pred_fallthru
          _
      $region40: #{tpu_custom_call.1} parent=5 // pred_fallthru
        _
      %p322 = scmp.le.s32.totalorder 1, %s26
      %p323 = scmp.lt.s32.totalorder %s26, 3
      %p324 = pnand %p322, %p323
      %p325 = pneg %p324
      // Predicated region
      $region49: #{tpu_custom_call.1} parent=5 // pred_check
        _
      $region50: #{tpu_custom_call.1} parent=5 // pred_check_branch
        %327 = sbr.rel (%p324) target = $region52
      $region51: #{tpu_custom_call.1} parent=5 // pred_region
        %s328 = ssub.s32 %s26, 1
        %s329 = sand.u32 %s39, 1
        %s330 = scalar_lea.sflag [#allocation4], %s329
        %s331 = sand.u32 %s39, 1
        %s332 = smul.addr %s331, 128
        %s333 = scalar_lea.vmem [#allocation3], %s332
        // Predicated region
        $region53: #{tpu_custom_call.1} parent=51 // pred_check
          %p334 = pneg %p52
        $region54: #{tpu_custom_call.1} parent=51 // pred_check_branch
          %336 = sbr.rel (%p334) target = $region56
        $region55: #{tpu_custom_call.1} parent=51 // pred_region
          %337 = dma.done %s330, 2048
        $region56: #{tpu_custom_call.1} parent=51 // pred_fallthru
          _
        %s338 = sand.u32 %s39, 1
        %s339 = scalar_lea.sflag [#allocation4], %s338
        %s340 = sand.u32 %s39, 1
        %s341 = smul.addr %s340, 128
        %s342 = scalar_lea.vmem [#allocation3], %s341
        %p343 = pneg %p52
        %p344 = pneg %p49
        %p345 = scmp.lt.s32.totalorder %s31, 1
        %s346 = scalar_select %p345, %s31, 1
        %s347 = smul.addr %s346, 8
        %s348 = scalar_lea.vmem %s1, %s347
        %p349 = pneg %p78
        %p350 = pneg %p75
        %p351 = pneg %p99
        %p352 = pneg %p96
        %p353 = pneg %p120
        %p354 = pneg %p117
        %p355 = pneg %p141
        %p356 = pneg %p138
        %p357 = pneg %p162
        %p358 = pneg %p159
        %p359 = pneg %p183
        %p360 = pneg %p180
        %p361 = pneg %p204
        %p362 = pneg %p201
        %p363 = pneg %p230
        %p364 = pneg %p227
        %s365 = sand.u32 %s217, 1
        %s366 = scalar_lea.sflag [#allocation5], %s365
        %s367 = sand.u32 %s217, 1
        %s368 = smul.addr %s367, 8
        %s369 = scalar_lea.vmem [#allocation6], %s368
        %p370 = pneg %p256
        %p371 = pneg %p253
        %s372 = sand.u32 %s243, 1
        %s373 = scalar_lea.sflag [#allocation8], %s372
        %s374 = sand.u32 %s243, 1
        %s375 = smul.addr %s374, 8
        %s376 = scalar_lea.vmem [#allocation7], %s375
        %s377 = smul.u32 8, %s31
        %p378 = scmp.lt.s32.totalorder %s31, 1
        %s379 = scalar_select %p378, %s31, 1
        %s380 = smul.addr %s379, 8
        %s381 = scalar_lea.vmem %s1, %s380
        %v382 = vld [vmem:[%s333] sm:$0xff]
        %v383 = vld [vmem:[%s333 + $0x8] sm:$0xff]
        %v384 = vld [vmem:[%s333 + $0x10] sm:$0xff]
        %v385 = vld [vmem:[%s333 + $0x18] sm:$0xff]
        %v386 = vld [vmem:[%s333 + $0x20] sm:$0xff]
        %v387 = vld [vmem:[%s333 + $0x28] sm:$0xff]
        %v388 = vld [vmem:[%s333 + $0x30] sm:$0xff]
        %v389 = vld [vmem:[%s333 + $0x38] sm:$0xff]
        %v390 = vld [vmem:[%s333 + $0x40] sm:$0xff]
        %v391 = vld [vmem:[%s333 + $0x48] sm:$0xff]
        %v392 = vld [vmem:[%s333 + $0x50] sm:$0xff]
        %v393 = vld [vmem:[%s333 + $0x58] sm:$0xff]
        %v394 = vld [vmem:[%s333 + $0x60] sm:$0xff]
        %v395 = vld [vmem:[%s333 + $0x68] sm:$0xff]
        %v396 = vld [vmem:[%s333 + $0x70] sm:$0xff]
        %v397 = vld [vmem:[%s333 + $0x78] sm:$0xff]
        %v398 = vld [vmem:[%s2] sm:$0xff]
        %v399 = vld [vmem:[%s2 + $0x8] sm:$0xff]
        %v400 = vld [vmem:[%s2 + $0x10] sm:$0xff]
        %v401 = vld [vmem:[%s2 + $0x18] sm:$0xff]
        %v402 = vld [vmem:[%s2 + $0x20] sm:$0xff]
        %v403 = vld [vmem:[%s2 + $0x28] sm:$0xff]
        %v404 = vld [vmem:[%s2 + $0x30] sm:$0xff]
        %v405 = vld [vmem:[%s2 + $0x38] sm:$0xff]
        %v406 = vld [vmem:[%s3] sm:$0x1]
        %v408 = vlaneseq
        %v409 = vshrl.u32 %v408, 7
        %v410 = vsub.s32 0, %v409
        %v411 = vrot.slane %v406, %v410
        %vm413 = vcmask 523264
        %v415 = vsel %vm413, %v382, 0
        %v418 = vsel %vm413, %v383, 0
        %v421 = vsel %vm413, %v384, 0
        %v424 = vsel %vm413, %v385, 0
        %v427 = vsel %vm413, %v386, 0
        %v430 = vsel %vm413, %v387, 0
        %v433 = vsel %vm413, %v388, 0
        %v436 = vsel %vm413, %v389, 0
        %v439 = vsel %vm413, %v390, 0
        %v442 = vsel %vm413, %v391, 0
        %v445 = vsel %vm413, %v392, 0
        %v448 = vsel %vm413, %v393, 0
        %v451 = vsel %vm413, %v394, 0
        %v454 = vsel %vm413, %v395, 0
        %v457 = vsel %vm413, %v396, 0
        %v460 = vsel %vm413, %v397, 0
        %462 = vmatprep.subr.mxu0 0.0
        %463 = vmatpush1.msra.mxu0 %v398
        %464 = vmatprep.subr.mxu0 0.0
        %465 = vmatpush1.msra.mxu0 %v399
        %466 = vmatprep.subr.mxu0 0.0
        %467 = vmatpush1.msra.mxu0 %v400
        %468 = vmatprep.subr.mxu0 0.0
        %469 = vmatpush1.msra.mxu0 %v401
        %470 = vmatprep.subr.mxu0 0.0
        %471 = vmatpush1.msra.mxu0 %v402
        %472 = vmatprep.subr.mxu0 0.0
        %473 = vmatpush1.msra.mxu0 %v403
        %474 = vmatprep.subr.mxu0 0.0
        %475 = vmatpush1.msra.mxu0 %v404
        %476 = vmatprep.subr.mxu0 0.0
        %477 = vmatpush1.msra.mxu0 %v405
        %478 = vmatprep.subr.mxu0 0.0
        %479 = vmatpush1.msra.mxu0 0.0
        %480 = vmatprep.subr.mxu0 0.0
        %481 = vmatpush1.msra.mxu0 0.0
        %482 = vmatprep.subr.mxu0 0.0
        %483 = vmatpush1.msra.mxu0 0.0
        %484 = vmatprep.subr.mxu0 0.0
        %485 = vmatpush1.msra.mxu0 0.0
        %486 = vmatprep.subr.mxu0 0.0
        %487 = vmatpush1.msra.mxu0 0.0
        %488 = vmatprep.subr.mxu0 0.0
        %489 = vmatpush1.msra.mxu0 0.0
        %490 = vmatprep.subr.mxu0 0.0
        %491 = vmatpush1.msra.mxu0 0.0
        %492 = vmatprep.subr.mxu0 0.0
        %493 = vmatpush1.msra.mxu0 0.0
        %494 = vmatprep.subr.mxu0 0.0
        %495 = vmatpush1.msra.mxu0 0.0
        %496 = vmatprep.subr.mxu0 0.0
        %497 = vmatpush1.msra.mxu0 0.0
        %498 = vmatprep.subr.mxu0 0.0
        %499 = vmatpush1.msra.mxu0 0.0
        %500 = vmatprep.subr.mxu0 0.0
        %501 = vmatpush1.msra.mxu0 0.0
        %502 = vmatprep.subr.mxu0 0.0
        %503 = vmatpush1.msra.mxu0 0.0
        %504 = vmatprep.subr.mxu0 0.0
        %505 = vmatpush1.msra.mxu0 0.0
        %506 = vmatprep.subr.mxu0 0.0
        %507 = vmatpush1.msra.mxu0 0.0
        %508 = vmatprep.subr.mxu0 0.0
        %509 = vmatpush1.msra.mxu0 0.0
        %510 = vmatprep.subr.mxu0 0.0
        %511 = vmatpush1.msra.mxu0 0.0
        %512 = vmatprep.subr.mxu0 0.0
        %513 = vmatpush1.msra.mxu0 0.0
        %514 = vmatprep.subr.mxu0 0.0
        %515 = vmatpush1.msra.mxu0 0.0
        %516 = vmatprep.subr.mxu0 0.0
        %517 = vmatpush1.msra.mxu0 0.0
        %518 = vmatprep.subr.mxu0 0.0
        %519 = vmatpush1.msra.mxu0 0.0
        %520 = vmatprep.subr.mxu0 0.0
        %521 = vmatpush1.msra.mxu0 0.0
        %522 = vmatprep.subr.mxu0 0.0
        %523 = vmatpush1.msra.mxu0 0.0
        %524 = vmatprep.subr.mxu0 0.0
        %525 = vmatpush1.msra.mxu0 0.0
        %526 = vmatprep.mubr.f32.mxu0 0.0
        %527 = vmatmul.mubr.f32.gmra.mrb[0].mxu0 %v415
        %v528 = vpop.f32.mrb[0].mxu0
        %v529 = vadd.f32 %v411, %v528
        %v530 = vpop.f32.mrb[0].mxu0
        %531 = vmatprep.mubr.f32.mxu0 0.0
        %532 = vmatmul.mubr.f32.gmra.mrb[0].mxu0 %v418
        %v533 = vpop.f32.mrb[0].mxu0
        %v534 = vadd.f32 %v411, %v533
        %v535 = vpop.f32.mrb[0].mxu0
        %536 = vmatprep.mubr.f32.mxu0 0.0
        %537 = vmatmul.mubr.f32.gmra.mrb[0].mxu0 %v421
        %v538 = vpop.f32.mrb[0].mxu0
        %v539 = vadd.f32 %v411, %v538
        %v540 = vpop.f32.mrb[0].mxu0
        %541 = vmatprep.mubr.f32.mxu0 0.0
        %542 = vmatmul.mubr.f32.gmra.mrb[0].mxu0 %v424
        %v543 = vpop.f32.mrb[0].mxu0
        %v544 = vadd.f32 %v411, %v543
        %v545 = vpop.f32.mrb[0].mxu0
        %546 = vmatprep.mubr.f32.mxu0 0.0
        %547 = vmatmul.mubr.f32.gmra.mrb[0].mxu0 %v427
        %v548 = vpop.f32.mrb[0].mxu0
        %v549 = vadd.f32 %v411, %v548
        %v550 = vpop.f32.mrb[0].mxu0
        %551 = vmatprep.mubr.f32.mxu0 0.0
        %552 = vmatmul.mubr.f32.gmra.mrb[0].mxu0 %v430
        %v553 = vpop.f32.mrb[0].mxu0
        %v554 = vadd.f32 %v411, %v553
        %v555 = vpop.f32.mrb[0].mxu0
        %556 = vmatprep.mubr.f32.mxu0 0.0
        %557 = vmatmul.mubr.f32.gmra.mrb[0].mxu0 %v433
        %v558 = vpop.f32.mrb[0].mxu0
        %v559 = vadd.f32 %v411, %v558
        %v560 = vpop.f32.mrb[0].mxu0
        %561 = vmatprep.mubr.f32.mxu0 0.0
        %562 = vmatmul.mubr.f32.gmra.mrb[0].mxu0 %v436
        %v563 = vpop.f32.mrb[0].mxu0
        %v564 = vadd.f32 %v411, %v563
        %v565 = vpop.f32.mrb[0].mxu0
        %566 = vmatprep.mubr.f32.mxu0 0.0
        %567 = vmatmul.mubr.f32.gmra.mrb[0].mxu0 %v439
        %v568 = vpop.f32.mrb[0].mxu0
        %v569 = vadd.f32 %v411, %v568
        %v570 = vpop.f32.mrb[0].mxu0
        %571 = vmatprep.mubr.f32.mxu0 0.0
        %572 = vmatmul.mubr.f32.gmra.mrb[0].mxu0 %v442
        %v573 = vpop.f32.mrb[0].mxu0
        %v574 = vadd.f32 %v411, %v573
        %v575 = vpop.f32.mrb[0].mxu0
        %576 = vmatprep.mubr.f32.mxu0 0.0
        %577 = vmatmul.mubr.f32.gmra.mrb[0].mxu0 %v445
        %v578 = vpop.f32.mrb[0].mxu0
        %v579 = vadd.f32 %v411, %v578
        %v580 = vpop.f32.mrb[0].mxu0
        %581 = vmatprep.mubr.f32.mxu0 0.0
        %582 = vmatmul.mubr.f32.gmra.mrb[0].mxu0 %v448
        %v583 = vpop.f32.mrb[0].mxu0
        %v584 = vadd.f32 %v411, %v583
        %v585 = vpop.f32.mrb[0].mxu0
        %586 = vmatprep.mubr.f32.mxu0 0.0
        %587 = vmatmul.mubr.f32.gmra.mrb[0].mxu0 %v451
        %v588 = vpop.f32.mrb[0].mxu0
        %v589 = vadd.f32 %v411, %v588
        %v590 = vpop.f32.mrb[0].mxu0
        %591 = vmatprep.mubr.f32.mxu0 0.0
        %592 = vmatmul.mubr.f32.gmra.mrb[0].mxu0 %v454
        %v593 = vpop.f32.mrb[0].mxu0
        %v594 = vadd.f32 %v411, %v593
        %v595 = vpop.f32.mrb[0].mxu0
        %596 = vmatprep.mubr.f32.mxu0 0.0
        %597 = vmatmul.mubr.f32.gmra.mrb[0].mxu0 %v457
        %v598 = vpop.f32.mrb[0].mxu0
        %v599 = vadd.f32 %v411, %v598
        %v600 = vpop.f32.mrb[0].mxu0
        %601 = vmatprep.mubr.f32.mxu0 0.0
        %602 = vmatmul.mubr.f32.gmra.mrb[0].mxu0 %v460
        %v603 = vpop.f32.mrb[0].mxu0
        %v604 = vadd.f32 %v411, %v603
        %v605 = vpop.f32.mrb[0].mxu0
        %606 = vdwg.mxu0
        %v607 = vld [vmem:[%s381] sm:$0xff]
        %v608 = vld [vmem:[%s4] sm:$0xff]
        %v609 = vld [vmem:[%s4 + $0x8] sm:$0xff]
        %v610 = vld [vmem:[%s4 + $0x10] sm:$0xff]
        %v611 = vld [vmem:[%s4 + $0x18] sm:$0xff]
        %v612 = vld [vmem:[%s5] sm:$0x1]
        %v614 = vlaneseq
        %v615 = vshrl.u32 %v614, 7
        %v616 = vsub.s32 0, %v615
        %v617 = vrot.slane %v612, %v616
        %vm619 = vcmask 261120
        %v621 = vsel %vm619, %v607, 0
        %623 = vmatprep.subr.mxu0 0.0
        %624 = vmatpush1.msra.mxu0 %v608
        %625 = vmatprep.subr.mxu0 0.0
        %626 = vmatpush1.msra.mxu0 %v609
        %627 = vmatprep.subr.mxu0 0.0
        %628 = vmatpush1.msra.mxu0 %v610
        %629 = vmatprep.subr.mxu0 0.0
        %630 = vmatpush1.msra.mxu0 %v611
        %631 = vmatprep.subr.mxu0 0.0
        %632 = vmatpush1.msra.mxu0 0.0
        %633 = vmatprep.subr.mxu0 0.0
        %634 = vmatpush1.msra.mxu0 0.0
        %635 = vmatprep.subr.mxu0 0.0
        %636 = vmatpush1.msra.mxu0 0.0
        %637 = vmatprep.subr.mxu0 0.0
        %638 = vmatpush1.msra.mxu0 0.0
        %639 = vmatprep.subr.mxu0 0.0
        %640 = vmatpush1.msra.mxu0 0.0
        %641 = vmatprep.subr.mxu0 0.0
        %642 = vmatpush1.msra.mxu0 0.0
        %643 = vmatprep.subr.mxu0 0.0
        %644 = vmatpush1.msra.mxu0 0.0
        %645 = vmatprep.subr.mxu0 0.0
        %646 = vmatpush1.msra.mxu0 0.0
        %647 = vmatprep.subr.mxu0 0.0
        %648 = vmatpush1.msra.mxu0 0.0
        %649 = vmatprep.subr.mxu0 0.0
        %650 = vmatpush1.msra.mxu0 0.0
        %651 = vmatprep.subr.mxu0 0.0
        %652 = vmatpush1.msra.mxu0 0.0
        %653 = vmatprep.subr.mxu0 0.0
        %654 = vmatpush1.msra.mxu0 0.0
        %655 = vmatprep.subr.mxu0 0.0
        %656 = vmatpush1.msra.mxu0 0.0
        %657 = vmatprep.subr.mxu0 0.0
        %658 = vmatpush1.msra.mxu0 0.0
        %659 = vmatprep.subr.mxu0 0.0
        %660 = vmatpush1.msra.mxu0 0.0
        %661 = vmatprep.subr.mxu0 0.0
        %662 = vmatpush1.msra.mxu0 0.0
        %663 = vmatprep.subr.mxu0 0.0
        %664 = vmatpush1.msra.mxu0 0.0
        %665 = vmatprep.subr.mxu0 0.0
        %666 = vmatpush1.msra.mxu0 0.0
        %667 = vmatprep.subr.mxu0 0.0
        %668 = vmatpush1.msra.mxu0 0.0
        %669 = vmatprep.subr.mxu0 0.0
        %670 = vmatpush1.msra.mxu0 0.0
        %671 = vmatprep.subr.mxu0 0.0
        %672 = vmatpush1.msra.mxu0 0.0
        %673 = vmatprep.subr.mxu0 0.0
        %674 = vmatpush1.msra.mxu0 0.0
        %675 = vmatprep.subr.mxu0 0.0
        %676 = vmatpush1.msra.mxu0 0.0
        %677 = vmatprep.subr.mxu0 0.0
        %678 = vmatpush1.msra.mxu0 0.0
        %679 = vmatprep.subr.mxu0 0.0
        %680 = vmatpush1.msra.mxu0 0.0
        %681 = vmatprep.subr.mxu0 0.0
        %682 = vmatpush1.msra.mxu0 0.0
        %683 = vmatprep.subr.mxu0 0.0
        %684 = vmatpush1.msra.mxu0 0.0
        %685 = vmatprep.subr.mxu0 0.0
        %686 = vmatpush1.msra.mxu0 0.0
        %687 = vmatprep.mubr.f32.mxu0 0.0
        %688 = vmatmul.mubr.f32.gmra.mrb[0].mxu0 %v621
        %v689 = vpop.f32.mrb[0].mxu0
        %v690 = vadd.f32 %v617, %v689
        %v691 = vpop.f32.mrb[0].mxu0
        %692 = vdwg.mxu0
        %v694 = vcombine.high %v690, %v690
        %v696 = vunpack.c.l.s4 1966171168
        %v697 = vunpack.c.0.s8 %v696
        %v698 = vlaneseq
        %v699 = vshrl.u32 %v698, 7
        %v700 = vsub.s32 %v697, %v699
        %v701 = vrot.slane %v690, %v700
        %v703 = vunpack.c.l.s4 1966171168
        %v704 = vunpack.c.0.s8 %v703
        %v705 = vlaneseq
        %v706 = vshrl.u32 %v705, 7
        %v707 = vsub.s32 %v704, %v706
        %v708 = vrot.slane %v694, %v707
        %v709 = vcombine.high %v701, %v701
        %v710 = vcombine.high %v708, %v708
        %v712 = vunpack.c.l.s4 1966171168
        %v713 = vunpack.c.0.s8 %v712
        %v714 = vlaneseq
        %v715 = vshrl.u32 %v714, 7
        %v716 = vsub.s32 %v713, %v715
        %v717 = vrot.slane %v701, %v716
        %v719 = vunpack.c.l.s4 1966171168
        %v720 = vunpack.c.0.s8 %v719
        %v721 = vlaneseq
        %v722 = vshrl.u32 %v721, 7
        %v723 = vsub.s32 %v720, %v722
        %v724 = vrot.slane %v708, %v723
        %v726 = vunpack.c.l.s4 1966171168
        %v727 = vunpack.c.0.s8 %v726
        %v728 = vlaneseq
        %v729 = vshrl.u32 %v728, 7
        %v730 = vsub.s32 %v727, %v729
        %v731 = vrot.slane %v709, %v730
        %v733 = vunpack.c.l.s4 1966171168
        %v734 = vunpack.c.0.s8 %v733
        %v735 = vlaneseq
        %v736 = vshrl.u32 %v735, 7
        %v737 = vsub.s32 %v734, %v736
        %v738 = vrot.slane %v710, %v737
        %v739 = vcombine.high %v717, %v717
        %v740 = vcombine.high %v724, %v724
        %v741 = vcombine.high %v731, %v731
        %v742 = vcombine.high %v738, %v738
        %v743 = vlaneseq
        %v744 = vshrl.u32 %v743, 7
        %v745 = vsub.s32 0, %v744
        %v746 = vrot.slane %v717, %v745
        %v747 = vlaneseq
        %v748 = vshrl.u32 %v747, 7
        %v749 = vsub.s32 0, %v748
        %v750 = vrot.slane %v731, %v749
        %v751 = vlaneseq
        %v752 = vshrl.u32 %v751, 7
        %v753 = vsub.s32 0, %v752
        %v754 = vrot.slane %v739, %v753
        %v755 = vlaneseq
        %v756 = vshrl.u32 %v755, 7
        %v757 = vsub.s32 0, %v756
        %v758 = vrot.slane %v741, %v757
        %v759 = vlaneseq
        %v760 = vshrl.u32 %v759, 7
        %v761 = vsub.s32 0, %v760
        %v762 = vrot.slane %v724, %v761
        %v763 = vlaneseq
        %v764 = vshrl.u32 %v763, 7
        %v765 = vsub.s32 0, %v764
        %v766 = vrot.slane %v738, %v765
        %v767 = vlaneseq
        %v768 = vshrl.u32 %v767, 7
        %v769 = vsub.s32 0, %v768
        %v770 = vrot.slane %v740, %v769
        %v771 = vlaneseq
        %v772 = vshrl.u32 %v771, 7
        %v773 = vsub.s32 0, %v772
        %v774 = vrot.slane %v742, %v773
        %v783 = vadd.f32 %v529, %v746
        %v784 = vadd.f32 %v534, %v746
        %v785 = vadd.f32 %v539, %v750
        %v786 = vadd.f32 %v544, %v750
        %v787 = vadd.f32 %v549, %v754
        %v788 = vadd.f32 %v554, %v754
        %v789 = vadd.f32 %v559, %v758
        %v790 = vadd.f32 %v564, %v758
        %v791 = vadd.f32 %v569, %v762
        %v792 = vadd.f32 %v574, %v762
        %v793 = vadd.f32 %v579, %v766
        %v794 = vadd.f32 %v584, %v766
        %v795 = vadd.f32 %v589, %v770
        %v796 = vadd.f32 %v594, %v770
        %v797 = vadd.f32 %v599, %v774
        %v798 = vadd.f32 %v604, %v774
        %v799 = vtanh.pop %v783
        %v800 = vtanh.pop %v784
        %v801 = vtanh.pop %v785
        %v802 = vtanh.pop %v786
        %v803 = vtanh.pop %v787
        %v804 = vtanh.pop %v788
        %v805 = vtanh.pop %v789
        %v806 = vtanh.pop %v790
        %v807 = vtanh.pop %v791
        %v808 = vtanh.pop %v792
        %v809 = vtanh.pop %v793
        %v810 = vtanh.pop %v794
        %v811 = vtanh.pop %v795
        %v812 = vtanh.pop %v796
        %v813 = vtanh.pop %v797
        %v814 = vtanh.pop %v798
        %v815 = vld [vmem:[%s6] sm:$0x1]
        %v817 = vsel %vm619, %v815, 0
        %v820 = vsel %vm619, %v799, 0
        %v823 = vsel %vm619, %v800, 0
        %825 = vmatprep.subr.mxu0 0.0
        %826 = vmatpush1.xpose.msra.mxu0 %v820
        %827 = vmatprep.subr.mxu0 0.0
        %828 = vmatpush1.xpose.msra.mxu0 %v823
        %829 = vmatprep.subr.mxu0 0.0
        %830 = vmatpush1.xpose.msra.mxu0 0.0
        %831 = vmatprep.subr.mxu0 0.0
        %832 = vmatpush1.xpose.msra.mxu0 0.0
        %833 = vmatprep.subr.mxu0 0.0
        %834 = vmatpush1.xpose.msra.mxu0 0.0
        %835 = vmatprep.subr.mxu0 0.0
        %836 = vmatpush1.xpose.msra.mxu0 0.0
        %837 = vmatprep.subr.mxu0 0.0
        %838 = vmatpush1.xpose.msra.mxu0 0.0
        %839 = vmatprep.subr.mxu0 0.0
        %840 = vmatpush1.xpose.msra.mxu0 0.0
        %841 = vmatprep.subr.mxu0 0.0
        %842 = vmatpush1.xpose.msra.mxu0 0.0
        %843 = vmatprep.subr.mxu0 0.0
        %844 = vmatpush1.xpose.msra.mxu0 0.0
        %845 = vmatprep.subr.mxu0 0.0
        %846 = vmatpush1.xpose.msra.mxu0 0.0
        %847 = vmatprep.subr.mxu0 0.0
        %848 = vmatpush1.xpose.msra.mxu0 0.0
        %849 = vmatprep.subr.mxu0 0.0
        %850 = vmatpush1.xpose.msra.mxu0 0.0
        %851 = vmatprep.subr.mxu0 0.0
        %852 = vmatpush1.xpose.msra.mxu0 0.0
        %853 = vmatprep.subr.mxu0 0.0
        %854 = vmatpush1.xpose.msra.mxu0 0.0
        %855 = vmatprep.subr.mxu0 0.0
        %856 = vmatpush1.xpose.msra.mxu0 0.0
        %857 = vmatprep.subr.mxu0 0.0
        %858 = vmatpush1.xpose.msra.mxu0 0.0
        %859 = vmatprep.subr.mxu0 0.0
        %860 = vmatpush1.xpose.msra.mxu0 0.0
        %861 = vmatprep.subr.mxu0 0.0
        %862 = vmatpush1.xpose.msra.mxu0 0.0
        %863 = vmatprep.subr.mxu0 0.0
        %864 = vmatpush1.xpose.msra.mxu0 0.0
        %865 = vmatprep.subr.mxu0 0.0
        %866 = vmatpush1.xpose.msra.mxu0 0.0
        %867 = vmatprep.subr.mxu0 0.0
        %868 = vmatpush1.xpose.msra.mxu0 0.0
        %869 = vmatprep.subr.mxu0 0.0
        %870 = vmatpush1.xpose.msra.mxu0 0.0
        %871 = vmatprep.subr.mxu0 0.0
        %872 = vmatpush1.xpose.msra.mxu0 0.0
        %873 = vmatprep.subr.mxu0 0.0
        %874 = vmatpush1.xpose.msra.mxu0 0.0
        %875 = vmatprep.subr.mxu0 0.0
        %876 = vmatpush1.xpose.msra.mxu0 0.0
        %877 = vmatprep.subr.mxu0 0.0
        %878 = vmatpush1.xpose.msra.mxu0 0.0
        %879 = vmatprep.subr.mxu0 0.0
        %880 = vmatpush1.xpose.msra.mxu0 0.0
        %881 = vmatprep.subr.mxu0 0.0
        %882 = vmatpush1.xpose.msra.mxu0 0.0
        %883 = vmatprep.subr.mxu0 0.0
        %884 = vmatpush1.xpose.msra.mxu0 0.0
        %885 = vmatprep.subr.mxu0 0.0
        %886 = vmatpush1.xpose.msra.mxu0 0.0
        %887 = vmatprep.subr.mxu0 0.0
        %888 = vmatpush1.xpose.msra.mxu0 0.0
        %889 = vmatprep.mubr.f32.mxu0 0.0
        %890 = vmatmul.mubr.f32.gmra.mrb[0].mxu0 %v817
        %v891 = vpop.f32.mrb[0].mxu0
        %v892 = vadd.f32 0.0, %v891
        %v893 = vpop.f32.mrb[0].mxu0
        %894 = vdwg.mxu0
        %v896 = vsel %vm619, %v801, 0
        %v899 = vsel %vm619, %v802, 0
        %901 = vmatprep.subr.mxu0 0.0
        %902 = vmatpush1.xpose.msra.mxu0 %v896
        %903 = vmatprep.subr.mxu0 0.0
        %904 = vmatpush1.xpose.msra.mxu0 %v899
        %905 = vmatprep.subr.mxu0 0.0
        %906 = vmatpush1.xpose.msra.mxu0 0.0
        %907 = vmatprep.subr.mxu0 0.0
        %908 = vmatpush1.xpose.msra.mxu0 0.0
        %909 = vmatprep.subr.mxu0 0.0
        %910 = vmatpush1.xpose.msra.mxu0 0.0
        %911 = vmatprep.subr.mxu0 0.0
        %912 = vmatpush1.xpose.msra.mxu0 0.0
        %913 = vmatprep.subr.mxu0 0.0
        %914 = vmatpush1.xpose.msra.mxu0 0.0
        %915 = vmatprep.subr.mxu0 0.0
        %916 = vmatpush1.xpose.msra.mxu0 0.0
        %917 = vmatprep.subr.mxu0 0.0
        %918 = vmatpush1.xpose.msra.mxu0 0.0
        %919 = vmatprep.subr.mxu0 0.0
        %920 = vmatpush1.xpose.msra.mxu0 0.0
        %921 = vmatprep.subr.mxu0 0.0
        %922 = vmatpush1.xpose.msra.mxu0 0.0
        %923 = vmatprep.subr.mxu0 0.0
        %924 = vmatpush1.xpose.msra.mxu0 0.0
        %925 = vmatprep.subr.mxu0 0.0
        %926 = vmatpush1.xpose.msra.mxu0 0.0
        %927 = vmatprep.subr.mxu0 0.0
        %928 = vmatpush1.xpose.msra.mxu0 0.0
        %929 = vmatprep.subr.mxu0 0.0
        %930 = vmatpush1.xpose.msra.mxu0 0.0
        %931 = vmatprep.subr.mxu0 0.0
        %932 = vmatpush1.xpose.msra.mxu0 0.0
        %933 = vmatprep.subr.mxu0 0.0
        %934 = vmatpush1.xpose.msra.mxu0 0.0
        %935 = vmatprep.subr.mxu0 0.0
        %936 = vmatpush1.xpose.msra.mxu0 0.0
        %937 = vmatprep.subr.mxu0 0.0
        %938 = vmatpush1.xpose.msra.mxu0 0.0
        %939 = vmatprep.subr.mxu0 0.0
        %940 = vmatpush1.xpose.msra.mxu0 0.0
        %941 = vmatprep.subr.mxu0 0.0
        %942 = vmatpush1.xpose.msra.mxu0 0.0
        %943 = vmatprep.subr.mxu0 0.0
        %944 = vmatpush1.xpose.msra.mxu0 0.0
        %945 = vmatprep.subr.mxu0 0.0
        %946 = vmatpush1.xpose.msra.mxu0 0.0
        %947 = vmatprep.subr.mxu0 0.0
        %948 = vmatpush1.xpose.msra.mxu0 0.0
        %949 = vmatprep.subr.mxu0 0.0
        %950 = vmatpush1.xpose.msra.mxu0 0.0
        %951 = vmatprep.subr.mxu0 0.0
        %952 = vmatpush1.xpose.msra.mxu0 0.0
        %953 = vmatprep.subr.mxu0 0.0
        %954 = vmatpush1.xpose.msra.mxu0 0.0
        %955 = vmatprep.subr.mxu0 0.0
        %956 = vmatpush1.xpose.msra.mxu0 0.0
        %957 = vmatprep.subr.mxu0 0.0
        %958 = vmatpush1.xpose.msra.mxu0 0.0
        %959 = vmatprep.subr.mxu0 0.0
        %960 = vmatpush1.xpose.msra.mxu0 0.0
        %961 = vmatprep.subr.mxu0 0.0
        %962 = vmatpush1.xpose.msra.mxu0 0.0
        %963 = vmatprep.subr.mxu0 0.0
        %964 = vmatpush1.xpose.msra.mxu0 0.0
        %965 = vmatprep.mubr.f32.mxu0 0.0
        %966 = vmatmul.mubr.f32.gmra.mrb[0].mxu0 %v817
        %v967 = vpop.f32.mrb[0].mxu0
        %v968 = vadd.f32 0.0, %v967
        %v969 = vpop.f32.mrb[0].mxu0
        %970 = vdwg.mxu0
        %v972 = vsel %vm619, %v803, 0
        %v975 = vsel %vm619, %v804, 0
        %977 = vmatprep.subr.mxu0 0.0
        %978 = vmatpush1.xpose.msra.mxu0 %v972
        %979 = vmatprep.subr.mxu0 0.0
        %980 = vmatpush1.xpose.msra.mxu0 %v975
        %981 = vmatprep.subr.mxu0 0.0
        %982 = vmatpush1.xpose.msra.mxu0 0.0
        %983 = vmatprep.subr.mxu0 0.0
        %984 = vmatpush1.xpose.msra.mxu0 0.0
        %985 = vmatprep.subr.mxu0 0.0
        %986 = vmatpush1.xpose.msra.mxu0 0.0
        %987 = vmatprep.subr.mxu0 0.0
        %988 = vmatpush1.xpose.msra.mxu0 0.0
        %989 = vmatprep.subr.mxu0 0.0
        %990 = vmatpush1.xpose.msra.mxu0 0.0
        %991 = vmatprep.subr.mxu0 0.0
        %992 = vmatpush1.xpose.msra.mxu0 0.0
        %993 = vmatprep.subr.mxu0 0.0
        %994 = vmatpush1.xpose.msra.mxu0 0.0
        %995 = vmatprep.subr.mxu0 0.0
        %996 = vmatpush1.xpose.msra.mxu0 0.0
        %997 = vmatprep.subr.mxu0 0.0
        %998 = vmatpush1.xpose.msra.mxu0 0.0
        %999 = vmatprep.subr.mxu0 0.0
        %1000 = vmatpush1.xpose.msra.mxu0 0.0
        %1001 = vmatprep.subr.mxu0 0.0
        %1002 = vmatpush1.xpose.msra.mxu0 0.0
        %1003 = vmatprep.subr.mxu0 0.0
        %1004 = vmatpush1.xpose.msra.mxu0 0.0
        %1005 = vmatprep.subr.mxu0 0.0
        %1006 = vmatpush1.xpose.msra.mxu0 0.0
        %1007 = vmatprep.subr.mxu0 0.0
        %1008 = vmatpush1.xpose.msra.mxu0 0.0
        %1009 = vmatprep.subr.mxu0 0.0
        %1010 = vmatpush1.xpose.msra.mxu0 0.0
        %1011 = vmatprep.subr.mxu0 0.0
        %1012 = vmatpush1.xpose.msra.mxu0 0.0
        %1013 = vmatprep.subr.mxu0 0.0
        %1014 = vmatpush1.xpose.msra.mxu0 0.0
        %1015 = vmatprep.subr.mxu0 0.0
        %1016 = vmatpush1.xpose.msra.mxu0 0.0
        %1017 = vmatprep.subr.mxu0 0.0
        %1018 = vmatpush1.xpose.msra.mxu0 0.0
        %1019 = vmatprep.subr.mxu0 0.0
        %1020 = vmatpush1.xpose.msra.mxu0 0.0
        %1021 = vmatprep.subr.mxu0 0.0
        %1022 = vmatpush1.xpose.msra.mxu0 0.0
        %1023 = vmatprep.subr.mxu0 0.0
        %1024 = vmatpush1.xpose.msra.mxu0 0.0
        %1025 = vmatprep.subr.mxu0 0.0
        %1026 = vmatpush1.xpose.msra.mxu0 0.0
        %1027 = vmatprep.subr.mxu0 0.0
        %1028 = vmatpush1.xpose.msra.mxu0 0.0
        %1029 = vmatprep.subr.mxu0 0.0
        %1030 = vmatpush1.xpose.msra.mxu0 0.0
        %1031 = vmatprep.subr.mxu0 0.0
        %1032 = vmatpush1.xpose.msra.mxu0 0.0
        %1033 = vmatprep.subr.mxu0 0.0
        %1034 = vmatpush1.xpose.msra.mxu0 0.0
        %1035 = vmatprep.subr.mxu0 0.0
        %1036 = vmatpush1.xpose.msra.mxu0 0.0
        %1037 = vmatprep.subr.mxu0 0.0
        %1038 = vmatpush1.xpose.msra.mxu0 0.0
        %1039 = vmatprep.subr.mxu0 0.0
        %1040 = vmatpush1.xpose.msra.mxu0 0.0
        %1041 = vmatprep.mubr.f32.mxu0 0.0
        %1042 = vmatmul.mubr.f32.gmra.mrb[0].mxu0 %v817
        %v1043 = vpop.f32.mrb[0].mxu0
        %v1044 = vadd.f32 0.0, %v1043
        %v1045 = vpop.f32.mrb[0].mxu0
        %1046 = vdwg.mxu0
        %v1048 = vsel %vm619, %v805, 0
        %v1051 = vsel %vm619, %v806, 0
        %1053 = vmatprep.subr.mxu0 0.0
        %1054 = vmatpush1.xpose.msra.mxu0 %v1048
        %1055 = vmatprep.subr.mxu0 0.0
        %1056 = vmatpush1.xpose.msra.mxu0 %v1051
        %1057 = vmatprep.subr.mxu0 0.0
        %1058 = vmatpush1.xpose.msra.mxu0 0.0
        %1059 = vmatprep.subr.mxu0 0.0
        %1060 = vmatpush1.xpose.msra.mxu0 0.0
        %1061 = vmatprep.subr.mxu0 0.0
        %1062 = vmatpush1.xpose.msra.mxu0 0.0
        %1063 = vmatprep.subr.mxu0 0.0
        %1064 = vmatpush1.xpose.msra.mxu0 0.0
        %1065 = vmatprep.subr.mxu0 0.0
        %1066 = vmatpush1.xpose.msra.mxu0 0.0
        %1067 = vmatprep.subr.mxu0 0.0
        %1068 = vmatpush1.xpose.msra.mxu0 0.0
        %1069 = vmatprep.subr.mxu0 0.0
        %1070 = vmatpush1.xpose.msra.mxu0 0.0
        %1071 = vmatprep.subr.mxu0 0.0
        %1072 = vmatpush1.xpose.msra.mxu0 0.0
        %1073 = vmatprep.subr.mxu0 0.0
        %1074 = vmatpush1.xpose.msra.mxu0 0.0
        %1075 = vmatprep.subr.mxu0 0.0
        %1076 = vmatpush1.xpose.msra.mxu0 0.0
        %1077 = vmatprep.subr.mxu0 0.0
        %1078 = vmatpush1.xpose.msra.mxu0 0.0
        %1079 = vmatprep.subr.mxu0 0.0
        %1080 = vmatpush1.xpose.msra.mxu0 0.0
        %1081 = vmatprep.subr.mxu0 0.0
        %1082 = vmatpush1.xpose.msra.mxu0 0.0
        %1083 = vmatprep.subr.mxu0 0.0
        %1084 = vmatpush1.xpose.msra.mxu0 0.0
        %1085 = vmatprep.subr.mxu0 0.0
        %1086 = vmatpush1.xpose.msra.mxu0 0.0
        %1087 = vmatprep.subr.mxu0 0.0
        %1088 = vmatpush1.xpose.msra.mxu0 0.0
        %1089 = vmatprep.subr.mxu0 0.0
        %1090 = vmatpush1.xpose.msra.mxu0 0.0
        %1091 = vmatprep.subr.mxu0 0.0
        %1092 = vmatpush1.xpose.msra.mxu0 0.0
        %1093 = vmatprep.subr.mxu0 0.0
        %1094 = vmatpush1.xpose.msra.mxu0 0.0
        %1095 = vmatprep.subr.mxu0 0.0
        %1096 = vmatpush1.xpose.msra.mxu0 0.0
        %1097 = vmatprep.subr.mxu0 0.0
        %1098 = vmatpush1.xpose.msra.mxu0 0.0
        %1099 = vmatprep.subr.mxu0 0.0
        %1100 = vmatpush1.xpose.msra.mxu0 0.0
        %1101 = vmatprep.subr.mxu0 0.0
        %1102 = vmatpush1.xpose.msra.mxu0 0.0
        %1103 = vmatprep.subr.mxu0 0.0
        %1104 = vmatpush1.xpose.msra.mxu0 0.0
        %1105 = vmatprep.subr.mxu0 0.0
        %1106 = vmatpush1.xpose.msra.mxu0 0.0
        %1107 = vmatprep.subr.mxu0 0.0
        %1108 = vmatpush1.xpose.msra.mxu0 0.0
        %1109 = vmatprep.subr.mxu0 0.0
        %1110 = vmatpush1.xpose.msra.mxu0 0.0
        %1111 = vmatprep.subr.mxu0 0.0
        %1112 = vmatpush1.xpose.msra.mxu0 0.0
        %1113 = vmatprep.subr.mxu0 0.0
        %1114 = vmatpush1.xpose.msra.mxu0 0.0
        %1115 = vmatprep.subr.mxu0 0.0
        %1116 = vmatpush1.xpose.msra.mxu0 0.0
        %1117 = vmatprep.mubr.f32.mxu0 0.0
        %1118 = vmatmul.mubr.f32.gmra.mrb[0].mxu0 %v817
        %v1119 = vpop.f32.mrb[0].mxu0
        %v1120 = vadd.f32 0.0, %v1119
        %v1121 = vpop.f32.mrb[0].mxu0
        %1122 = vdwg.mxu0
        %v1124 = vsel %vm619, %v807, 0
        %v1127 = vsel %vm619, %v808, 0
        %1129 = vmatprep.subr.mxu0 0.0
        %1130 = vmatpush1.xpose.msra.mxu0 %v1124
        %1131 = vmatprep.subr.mxu0 0.0
        %1132 = vmatpush1.xpose.msra.mxu0 %v1127
        %1133 = vmatprep.subr.mxu0 0.0
        %1134 = vmatpush1.xpose.msra.mxu0 0.0
        %1135 = vmatprep.subr.mxu0 0.0
        %1136 = vmatpush1.xpose.msra.mxu0 0.0
        %1137 = vmatprep.subr.mxu0 0.0
        %1138 = vmatpush1.xpose.msra.mxu0 0.0
        %1139 = vmatprep.subr.mxu0 0.0
        %1140 = vmatpush1.xpose.msra.mxu0 0.0
        %1141 = vmatprep.subr.mxu0 0.0
        %1142 = vmatpush1.xpose.msra.mxu0 0.0
        %1143 = vmatprep.subr.mxu0 0.0
        %1144 = vmatpush1.xpose.msra.mxu0 0.0
        %1145 = vmatprep.subr.mxu0 0.0
        %1146 = vmatpush1.xpose.msra.mxu0 0.0
        %1147 = vmatprep.subr.mxu0 0.0
        %1148 = vmatpush1.xpose.msra.mxu0 0.0
        %1149 = vmatprep.subr.mxu0 0.0
        %1150 = vmatpush1.xpose.msra.mxu0 0.0
        %1151 = vmatprep.subr.mxu0 0.0
        %1152 = vmatpush1.xpose.msra.mxu0 0.0
        %1153 = vmatprep.subr.mxu0 0.0
        %1154 = vmatpush1.xpose.msra.mxu0 0.0
        %1155 = vmatprep.subr.mxu0 0.0
        %1156 = vmatpush1.xpose.msra.mxu0 0.0
        %1157 = vmatprep.subr.mxu0 0.0
        %1158 = vmatpush1.xpose.msra.mxu0 0.0
        %1159 = vmatprep.subr.mxu0 0.0
        %1160 = vmatpush1.xpose.msra.mxu0 0.0
        %1161 = vmatprep.subr.mxu0 0.0
        %1162 = vmatpush1.xpose.msra.mxu0 0.0
        %1163 = vmatprep.subr.mxu0 0.0
        %1164 = vmatpush1.xpose.msra.mxu0 0.0
        %1165 = vmatprep.subr.mxu0 0.0
        %1166 = vmatpush1.xpose.msra.mxu0 0.0
        %1167 = vmatprep.subr.mxu0 0.0
        %1168 = vmatpush1.xpose.msra.mxu0 0.0
        %1169 = vmatprep.subr.mxu0 0.0
        %1170 = vmatpush1.xpose.msra.mxu0 0.0
        %1171 = vmatprep.subr.mxu0 0.0
        %1172 = vmatpush1.xpose.msra.mxu0 0.0
        %1173 = vmatprep.subr.mxu0 0.0
        %1174 = vmatpush1.xpose.msra.mxu0 0.0
        %1175 = vmatprep.subr.mxu0 0.0
        %1176 = vmatpush1.xpose.msra.mxu0 0.0
        %1177 = vmatprep.subr.mxu0 0.0
        %1178 = vmatpush1.xpose.msra.mxu0 0.0
        %1179 = vmatprep.subr.mxu0 0.0
        %1180 = vmatpush1.xpose.msra.mxu0 0.0
        %1181 = vmatprep.subr.mxu0 0.0
        %1182 = vmatpush1.xpose.msra.mxu0 0.0
        %1183 = vmatprep.subr.mxu0 0.0
        %1184 = vmatpush1.xpose.msra.mxu0 0.0
        %1185 = vmatprep.subr.mxu0 0.0
        %1186 = vmatpush1.xpose.msra.mxu0 0.0
        %1187 = vmatprep.subr.mxu0 0.0
        %1188 = vmatpush1.xpose.msra.mxu0 0.0
        %1189 = vmatprep.subr.mxu0 0.0
        %1190 = vmatpush1.xpose.msra.mxu0 0.0
        %1191 = vmatprep.subr.mxu0 0.0
        %1192 = vmatpush1.xpose.msra.mxu0 0.0
        %1193 = vmatprep.mubr.f32.mxu0 0.0
        %1194 = vmatmul.mubr.f32.gmra.mrb[0].mxu0 %v817
        %v1195 = vpop.f32.mrb[0].mxu0
        %v1196 = vadd.f32 0.0, %v1195
        %v1197 = vpop.f32.mrb[0].mxu0
        %1198 = vdwg.mxu0
        %v1200 = vsel %vm619, %v809, 0
        %v1203 = vsel %vm619, %v810, 0
        %1205 = vmatprep.subr.mxu0 0.0
        %1206 = vmatpush1.xpose.msra.mxu0 %v1200
        %1207 = vmatprep.subr.mxu0 0.0
        %1208 = vmatpush1.xpose.msra.mxu0 %v1203
        %1209 = vmatprep.subr.mxu0 0.0
        %1210 = vmatpush1.xpose.msra.mxu0 0.0
        %1211 = vmatprep.subr.mxu0 0.0
        %1212 = vmatpush1.xpose.msra.mxu0 0.0
        %1213 = vmatprep.subr.mxu0 0.0
        %1214 = vmatpush1.xpose.msra.mxu0 0.0
        %1215 = vmatprep.subr.mxu0 0.0
        %1216 = vmatpush1.xpose.msra.mxu0 0.0
        %1217 = vmatprep.subr.mxu0 0.0
        %1218 = vmatpush1.xpose.msra.mxu0 0.0
        %1219 = vmatprep.subr.mxu0 0.0
        %1220 = vmatpush1.xpose.msra.mxu0 0.0
        %1221 = vmatprep.subr.mxu0 0.0
        %1222 = vmatpush1.xpose.msra.mxu0 0.0
        %1223 = vmatprep.subr.mxu0 0.0
        %1224 = vmatpush1.xpose.msra.mxu0 0.0
        %1225 = vmatprep.subr.mxu0 0.0
        %1226 = vmatpush1.xpose.msra.mxu0 0.0
        %1227 = vmatprep.subr.mxu0 0.0
        %1228 = vmatpush1.xpose.msra.mxu0 0.0
        %1229 = vmatprep.subr.mxu0 0.0
        %1230 = vmatpush1.xpose.msra.mxu0 0.0
        %1231 = vmatprep.subr.mxu0 0.0
        %1232 = vmatpush1.xpose.msra.mxu0 0.0
        %1233 = vmatprep.subr.mxu0 0.0
        %1234 = vmatpush1.xpose.msra.mxu0 0.0
        %1235 = vmatprep.subr.mxu0 0.0
        %1236 = vmatpush1.xpose.msra.mxu0 0.0
        %1237 = vmatprep.subr.mxu0 0.0
        %1238 = vmatpush1.xpose.msra.mxu0 0.0
        %1239 = vmatprep.subr.mxu0 0.0
        %1240 = vmatpush1.xpose.msra.mxu0 0.0
        %1241 = vmatprep.subr.mxu0 0.0
        %1242 = vmatpush1.xpose.msra.mxu0 0.0
        %1243 = vmatprep.subr.mxu0 0.0
        %1244 = vmatpush1.xpose.msra.mxu0 0.0
        %1245 = vmatprep.subr.mxu0 0.0
        %1246 = vmatpush1.xpose.msra.mxu0 0.0
        %1247 = vmatprep.subr.mxu0 0.0
        %1248 = vmatpush1.xpose.msra.mxu0 0.0
        %1249 = vmatprep.subr.mxu0 0.0
        %1250 = vmatpush1.xpose.msra.mxu0 0.0
        %1251 = vmatprep.subr.mxu0 0.0
        %1252 = vmatpush1.xpose.msra.mxu0 0.0
        %1253 = vmatprep.subr.mxu0 0.0
        %1254 = vmatpush1.xpose.msra.mxu0 0.0
        %1255 = vmatprep.subr.mxu0 0.0
        %1256 = vmatpush1.xpose.msra.mxu0 0.0
        %1257 = vmatprep.subr.mxu0 0.0
        %1258 = vmatpush1.xpose.msra.mxu0 0.0
        %1259 = vmatprep.subr.mxu0 0.0
        %1260 = vmatpush1.xpose.msra.mxu0 0.0
        %1261 = vmatprep.subr.mxu0 0.0
        %1262 = vmatpush1.xpose.msra.mxu0 0.0
        %1263 = vmatprep.subr.mxu0 0.0
        %1264 = vmatpush1.xpose.msra.mxu0 0.0
        %1265 = vmatprep.subr.mxu0 0.0
        %1266 = vmatpush1.xpose.msra.mxu0 0.0
        %1267 = vmatprep.subr.mxu0 0.0
        %1268 = vmatpush1.xpose.msra.mxu0 0.0
        %1269 = vmatprep.mubr.f32.mxu0 0.0
        %1270 = vmatmul.mubr.f32.gmra.mrb[0].mxu0 %v817
        %v1271 = vpop.f32.mrb[0].mxu0
        %v1272 = vadd.f32 0.0, %v1271
        %v1273 = vpop.f32.mrb[0].mxu0
        %1274 = vdwg.mxu0
        %v1276 = vsel %vm619, %v811, 0
        %v1279 = vsel %vm619, %v812, 0
        %1281 = vmatprep.subr.mxu0 0.0
        %1282 = vmatpush1.xpose.msra.mxu0 %v1276
        %1283 = vmatprep.subr.mxu0 0.0
        %1284 = vmatpush1.xpose.msra.mxu0 %v1279
        %1285 = vmatprep.subr.mxu0 0.0
        %1286 = vmatpush1.xpose.msra.mxu0 0.0
        %1287 = vmatprep.subr.mxu0 0.0
        %1288 = vmatpush1.xpose.msra.mxu0 0.0
        %1289 = vmatprep.subr.mxu0 0.0
        %1290 = vmatpush1.xpose.msra.mxu0 0.0
        %1291 = vmatprep.subr.mxu0 0.0
        %1292 = vmatpush1.xpose.msra.mxu0 0.0
        %1293 = vmatprep.subr.mxu0 0.0
        %1294 = vmatpush1.xpose.msra.mxu0 0.0
        %1295 = vmatprep.subr.mxu0 0.0
        %1296 = vmatpush1.xpose.msra.mxu0 0.0
        %1297 = vmatprep.subr.mxu0 0.0
        %1298 = vmatpush1.xpose.msra.mxu0 0.0
        %1299 = vmatprep.subr.mxu0 0.0
        %1300 = vmatpush1.xpose.msra.mxu0 0.0
        %1301 = vmatprep.subr.mxu0 0.0
        %1302 = vmatpush1.xpose.msra.mxu0 0.0
        %1303 = vmatprep.subr.mxu0 0.0
        %1304 = vmatpush1.xpose.msra.mxu0 0.0
        %1305 = vmatprep.subr.mxu0 0.0
        %1306 = vmatpush1.xpose.msra.mxu0 0.0
        %1307 = vmatprep.subr.mxu0 0.0
        %1308 = vmatpush1.xpose.msra.mxu0 0.0
        %1309 = vmatprep.subr.mxu0 0.0
        %1310 = vmatpush1.xpose.msra.mxu0 0.0
        %1311 = vmatprep.subr.mxu0 0.0
        %1312 = vmatpush1.xpose.msra.mxu0 0.0
        %1313 = vmatprep.subr.mxu0 0.0
        %1314 = vmatpush1.xpose.msra.mxu0 0.0
        %1315 = vmatprep.subr.mxu0 0.0
        %1316 = vmatpush1.xpose.msra.mxu0 0.0
        %1317 = vmatprep.subr.mxu0 0.0
        %1318 = vmatpush1.xpose.msra.mxu0 0.0
        %1319 = vmatprep.subr.mxu0 0.0
        %1320 = vmatpush1.xpose.msra.mxu0 0.0
        %1321 = vmatprep.subr.mxu0 0.0
        %1322 = vmatpush1.xpose.msra.mxu0 0.0
        %1323 = vmatprep.subr.mxu0 0.0
        %1324 = vmatpush1.xpose.msra.mxu0 0.0
        %1325 = vmatprep.subr.mxu0 0.0
        %1326 = vmatpush1.xpose.msra.mxu0 0.0
        %1327 = vmatprep.subr.mxu0 0.0
        %1328 = vmatpush1.xpose.msra.mxu0 0.0
        %1329 = vmatprep.subr.mxu0 0.0
        %1330 = vmatpush1.xpose.msra.mxu0 0.0
        %1331 = vmatprep.subr.mxu0 0.0
        %1332 = vmatpush1.xpose.msra.mxu0 0.0
        %1333 = vmatprep.subr.mxu0 0.0
        %1334 = vmatpush1.xpose.msra.mxu0 0.0
        %1335 = vmatprep.subr.mxu0 0.0
        %1336 = vmatpush1.xpose.msra.mxu0 0.0
        %1337 = vmatprep.subr.mxu0 0.0
        %1338 = vmatpush1.xpose.msra.mxu0 0.0
        %1339 = vmatprep.subr.mxu0 0.0
        %1340 = vmatpush1.xpose.msra.mxu0 0.0
        %1341 = vmatprep.subr.mxu0 0.0
        %1342 = vmatpush1.xpose.msra.mxu0 0.0
        %1343 = vmatprep.subr.mxu0 0.0
        %1344 = vmatpush1.xpose.msra.mxu0 0.0
        %1345 = vmatprep.mubr.f32.mxu0 0.0
        %1346 = vmatmul.mubr.f32.gmra.mrb[0].mxu0 %v817
        %v1347 = vpop.f32.mrb[0].mxu0
        %v1348 = vadd.f32 0.0, %v1347
        %v1349 = vpop.f32.mrb[0].mxu0
        %1350 = vdwg.mxu0
        %v1352 = vsel %vm619, %v813, 0
        %v1355 = vsel %vm619, %v814, 0
        %1357 = vmatprep.subr.mxu0 0.0
        %1358 = vmatpush1.xpose.msra.mxu0 %v1352
        %1359 = vmatprep.subr.mxu0 0.0
        %1360 = vmatpush1.xpose.msra.mxu0 %v1355
        %1361 = vmatprep.subr.mxu0 0.0
        %1362 = vmatpush1.xpose.msra.mxu0 0.0
        %1363 = vmatprep.subr.mxu0 0.0
        %1364 = vmatpush1.xpose.msra.mxu0 0.0
        %1365 = vmatprep.subr.mxu0 0.0
        %1366 = vmatpush1.xpose.msra.mxu0 0.0
        %1367 = vmatprep.subr.mxu0 0.0
        %1368 = vmatpush1.xpose.msra.mxu0 0.0
        %1369 = vmatprep.subr.mxu0 0.0
        %1370 = vmatpush1.xpose.msra.mxu0 0.0
        %1371 = vmatprep.subr.mxu0 0.0
        %1372 = vmatpush1.xpose.msra.mxu0 0.0
        %1373 = vmatprep.subr.mxu0 0.0
        %1374 = vmatpush1.xpose.msra.mxu0 0.0
        %1375 = vmatprep.subr.mxu0 0.0
        %1376 = vmatpush1.xpose.msra.mxu0 0.0
        %1377 = vmatprep.subr.mxu0 0.0
        %1378 = vmatpush1.xpose.msra.mxu0 0.0
        %1379 = vmatprep.subr.mxu0 0.0
        %1380 = vmatpush1.xpose.msra.mxu0 0.0
        %1381 = vmatprep.subr.mxu0 0.0
        %1382 = vmatpush1.xpose.msra.mxu0 0.0
        %1383 = vmatprep.subr.mxu0 0.0
        %1384 = vmatpush1.xpose.msra.mxu0 0.0
        %1385 = vmatprep.subr.mxu0 0.0
        %1386 = vmatpush1.xpose.msra.mxu0 0.0
        %1387 = vmatprep.subr.mxu0 0.0
        %1388 = vmatpush1.xpose.msra.mxu0 0.0
        %1389 = vmatprep.subr.mxu0 0.0
        %1390 = vmatpush1.xpose.msra.mxu0 0.0
        %1391 = vmatprep.subr.mxu0 0.0
        %1392 = vmatpush1.xpose.msra.mxu0 0.0
        %1393 = vmatprep.subr.mxu0 0.0
        %1394 = vmatpush1.xpose.msra.mxu0 0.0
        %1395 = vmatprep.subr.mxu0 0.0
        %1396 = vmatpush1.xpose.msra.mxu0 0.0
        %1397 = vmatprep.subr.mxu0 0.0
        %1398 = vmatpush1.xpose.msra.mxu0 0.0
        %1399 = vmatprep.subr.mxu0 0.0
        %1400 = vmatpush1.xpose.msra.mxu0 0.0
        %1401 = vmatprep.subr.mxu0 0.0
        %1402 = vmatpush1.xpose.msra.mxu0 0.0
        %1403 = vmatprep.subr.mxu0 0.0
        %1404 = vmatpush1.xpose.msra.mxu0 0.0
        %1405 = vmatprep.subr.mxu0 0.0
        %1406 = vmatpush1.xpose.msra.mxu0 0.0
        %1407 = vmatprep.subr.mxu0 0.0
        %1408 = vmatpush1.xpose.msra.mxu0 0.0
        %1409 = vmatprep.subr.mxu0 0.0
        %1410 = vmatpush1.xpose.msra.mxu0 0.0
        %1411 = vmatprep.subr.mxu0 0.0
        %1412 = vmatpush1.xpose.msra.mxu0 0.0
        %1413 = vmatprep.subr.mxu0 0.0
        %1414 = vmatpush1.xpose.msra.mxu0 0.0
        %1415 = vmatprep.subr.mxu0 0.0
        %1416 = vmatpush1.xpose.msra.mxu0 0.0
        %1417 = vmatprep.subr.mxu0 0.0
        %1418 = vmatpush1.xpose.msra.mxu0 0.0
        %1419 = vmatprep.subr.mxu0 0.0
        %1420 = vmatpush1.xpose.msra.mxu0 0.0
        %1421 = vmatprep.mubr.f32.mxu0 0.0
        %1422 = vmatmul.mubr.f32.gmra.mrb[0].mxu0 %v817
        %v1423 = vpop.f32.mrb[0].mxu0
        %v1424 = vadd.f32 0.0, %v1423
        %v1425 = vpop.f32.mrb[0].mxu0
        %1426 = vdwg.mxu0
        %s1427 = sld [smem:[#allocation2]]
        %v1428 = vstv %s1427
        %v1429 = vadd.f32 %v892, %v1428
        %v1430 = vadd.f32 %v968, %v1428
        %v1431 = vadd.f32 %v1044, %v1428
        %v1432 = vadd.f32 %v1120, %v1428
        %v1433 = vadd.f32 %v1196, %v1428
        %v1434 = vadd.f32 %v1272, %v1428
        %v1435 = vadd.f32 %v1348, %v1428
        %v1436 = vadd.f32 %v1424, %v1428
        %v1445 = vrot.slane %v1430, 7
        %vm1446 = vcmask 1041409
        %v1447 = vsel %vm1446, %v1445, %v1429
        %v1448 = vrot.slane %v1431, 6
        %vm1449 = vcmask 1042434
        %v1450 = vsel %vm1449, %v1448, %v1447
        %v1451 = vrot.slane %v1432, 5
        %vm1452 = vcmask 1043459
        %v1453 = vsel %vm1452, %v1451, %v1450
        %v1454 = vrot.slane %v1433, 4
        %vm1455 = vcmask 1044484
        %v1456 = vsel %vm1455, %v1454, %v1453
        %v1457 = vrot.slane %v1434, 3
        %vm1458 = vcmask 1045509
        %v1459 = vsel %vm1458, %v1457, %v1456
        %v1460 = vrot.slane %v1435, 2
        %vm1461 = vcmask 1046534
        %v1462 = vsel %vm1461, %v1460, %v1459
        %v1463 = vrot.slane %v1436, 1
        %vm1464 = vcmask 1047559
        %v1465 = vsel %vm1464, %v1463, %v1462
        %vm1467 = vcmask 130048
        %v1468 = vsel %vm1467, %v1465, -inf
        %1469 = vmax.xlane.f32.xlu0 %v1468
        %v1470 = vpop.xlane.xlu0 %1469
        %v1472 = vrot.slane %v1470, 1
        %v1473 = vrot.slane %v1470, 2
        %v1474 = vrot.slane %v1470, 3
        %v1475 = vrot.slane %v1470, 4
        %v1476 = vrot.slane %v1470, 5
        %v1477 = vrot.slane %v1470, 6
        %v1478 = vrot.slane %v1470, 7
        %v1487 = vsub.f32 %v1429, %v1470
        %v1488 = vsub.f32 %v1430, %v1472
        %v1489 = vsub.f32 %v1431, %v1473
        %v1490 = vsub.f32 %v1432, %v1474
        %v1491 = vsub.f32 %v1433, %v1475
        %v1492 = vsub.f32 %v1434, %v1476
        %v1493 = vsub.f32 %v1435, %v1477
        %v1494 = vsub.f32 %v1436, %v1478
        %v1495 = vmul.f32 %v1487, 1.442695
        %v1496 = vpow.pop %v1495
        %v1497 = vmul.f32 %v1488, 1.442695
        %v1498 = vpow.pop %v1497
        %v1499 = vmul.f32 %v1489, 1.442695
        %v1500 = vpow.pop %v1499
        %v1501 = vmul.f32 %v1490, 1.442695
        %v1502 = vpow.pop %v1501
        %v1503 = vmul.f32 %v1491, 1.442695
        %v1504 = vpow.pop %v1503
        %v1505 = vmul.f32 %v1492, 1.442695
        %v1506 = vpow.pop %v1505
        %v1507 = vmul.f32 %v1493, 1.442695
        %v1508 = vpow.pop %v1507
        %v1509 = vmul.f32 %v1494, 1.442695
        %v1510 = vpow.pop %v1509
        %v1519 = vrot.slane %v1498, 7
        %v1520 = vsel %vm1446, %v1519, %v1496
        %v1521 = vrot.slane %v1500, 6
        %v1522 = vsel %vm1449, %v1521, %v1520
        %v1523 = vrot.slane %v1502, 5
        %v1524 = vsel %vm1452, %v1523, %v1522
        %v1525 = vrot.slane %v1504, 4
        %v1526 = vsel %vm1455, %v1525, %v1524
        %v1527 = vrot.slane %v1506, 3
        %v1528 = vsel %vm1458, %v1527, %v1526
        %v1529 = vrot.slane %v1508, 2
        %v1530 = vsel %vm1461, %v1529, %v1528
        %v1531 = vrot.slane %v1510, 1
        %v1532 = vsel %vm1464, %v1531, %v1530
        %v1534 = vsel %vm1467, %v1532, 0.0
        %1535 = vadd.xlane.f32.xlu0 %v1534
        %v1536 = vpop.xlane.xlu0 %1535
        %v1538 = vrot.slane %v1536, 1
        %v1539 = vrot.slane %v1536, 2
        %v1540 = vrot.slane %v1536, 3
        %v1541 = vrot.slane %v1536, 4
        %v1542 = vrot.slane %v1536, 5
        %v1543 = vrot.slane %v1536, 6
        %v1544 = vrot.slane %v1536, 7
        %v1553 = vrcp.pop %v1536
        %v1554 = vmul.f32 %v1496, %v1553
        %v1555 = vrcp.pop %v1538
        %v1556 = vmul.f32 %v1498, %v1555
        %v1557 = vrcp.pop %v1539
        %v1558 = vmul.f32 %v1500, %v1557
        %v1559 = vrcp.pop %v1540
        %v1560 = vmul.f32 %v1502, %v1559
        %v1561 = vrcp.pop %v1541
        %v1562 = vmul.f32 %v1504, %v1561
        %v1563 = vrcp.pop %v1542
        %v1564 = vmul.f32 %v1506, %v1563
        %v1565 = vrcp.pop %v1543
        %v1566 = vmul.f32 %v1508, %v1565
        %v1567 = vrcp.pop %v1544
        %v1568 = vmul.f32 %v1510, %v1567
        %v1570 = vsel %vm1467, %v1554, 0
        %1572 = vmatprep.subr.mxu0 0.0
        %1573 = vmatpush1.msra.mxu0 %v382
        %1574 = vmatprep.subr.mxu0 0.0
        %1575 = vmatpush1.msra.mxu0 %v383
        %1576 = vmatprep.subr.mxu0 0.0
        %1577 = vmatpush1.msra.mxu0 0.0
        %1578 = vmatprep.subr.mxu0 0.0
        %1579 = vmatpush1.msra.mxu0 0.0
        %1580 = vmatprep.subr.mxu0 0.0
        %1581 = vmatpush1.msra.mxu0 0.0
        %1582 = vmatprep.subr.mxu0 0.0
        %1583 = vmatpush1.msra.mxu0 0.0
        %1584 = vmatprep.subr.mxu0 0.0
        %1585 = vmatpush1.msra.mxu0 0.0
        %1586 = vmatprep.subr.mxu0 0.0
        %1587 = vmatpush1.msra.mxu0 0.0
        %1588 = vmatprep.subr.mxu0 0.0
        %1589 = vmatpush1.msra.mxu0 0.0
        %1590 = vmatprep.subr.mxu0 0.0
        %1591 = vmatpush1.msra.mxu0 0.0
        %1592 = vmatprep.subr.mxu0 0.0
        %1593 = vmatpush1.msra.mxu0 0.0
        %1594 = vmatprep.subr.mxu0 0.0
        %1595 = vmatpush1.msra.mxu0 0.0
        %1596 = vmatprep.subr.mxu0 0.0
        %1597 = vmatpush1.msra.mxu0 0.0
        %1598 = vmatprep.subr.mxu0 0.0
        %1599 = vmatpush1.msra.mxu0 0.0
        %1600 = vmatprep.subr.mxu0 0.0
        %1601 = vmatpush1.msra.mxu0 0.0
        %1602 = vmatprep.subr.mxu0 0.0
        %1603 = vmatpush1.msra.mxu0 0.0
        %1604 = vmatprep.subr.mxu0 0.0
        %1605 = vmatpush1.msra.mxu0 0.0
        %1606 = vmatprep.subr.mxu0 0.0
        %1607 = vmatpush1.msra.mxu0 0.0
        %1608 = vmatprep.subr.mxu0 0.0
        %1609 = vmatpush1.msra.mxu0 0.0
        %1610 = vmatprep.subr.mxu0 0.0
        %1611 = vmatpush1.msra.mxu0 0.0
        %1612 = vmatprep.subr.mxu0 0.0
        %1613 = vmatpush1.msra.mxu0 0.0
        %1614 = vmatprep.subr.mxu0 0.0
        %1615 = vmatpush1.msra.mxu0 0.0
        %1616 = vmatprep.subr.mxu0 0.0
        %1617 = vmatpush1.msra.mxu0 0.0
        %1618 = vmatprep.subr.mxu0 0.0
        %1619 = vmatpush1.msra.mxu0 0.0
        %1620 = vmatprep.subr.mxu0 0.0
        %1621 = vmatpush1.msra.mxu0 0.0
        %1622 = vmatprep.subr.mxu0 0.0
        %1623 = vmatpush1.msra.mxu0 0.0
        %1624 = vmatprep.subr.mxu0 0.0
        %1625 = vmatpush1.msra.mxu0 0.0
        %1626 = vmatprep.subr.mxu0 0.0
        %1627 = vmatpush1.msra.mxu0 0.0
        %1628 = vmatprep.subr.mxu0 0.0
        %1629 = vmatpush1.msra.mxu0 0.0
        %1630 = vmatprep.subr.mxu0 0.0
        %1631 = vmatpush1.msra.mxu0 0.0
        %1632 = vmatprep.subr.mxu0 0.0
        %1633 = vmatpush1.msra.mxu0 0.0
        %1634 = vmatprep.subr.mxu0 0.0
        %1635 = vmatpush1.msra.mxu0 0.0
        %1636 = vmatprep.mubr.f32.mxu0 0.0
        %1637 = vmatmul.mubr.f32.gmra.mrb[0].mxu0 %v1570
        %v1638 = vpop.f32.mrb[0].mxu0
        %v1639 = vadd.f32 0.0, %v1638
        %v1640 = vpop.f32.mrb[0].mxu0
        %1641 = vdwg.mxu0
        %v1643 = vsel %vm1467, %v1556, 0
        %1645 = vmatprep.subr.mxu0 0.0
        %1646 = vmatpush1.msra.mxu0 %v384
        %1647 = vmatprep.subr.mxu0 0.0
        %1648 = vmatpush1.msra.mxu0 %v385
        %1649 = vmatprep.subr.mxu0 0.0
        %1650 = vmatpush1.msra.mxu0 0.0
        %1651 = vmatprep.subr.mxu0 0.0
        %1652 = vmatpush1.msra.mxu0 0.0
        %1653 = vmatprep.subr.mxu0 0.0
        %1654 = vmatpush1.msra.mxu0 0.0
        %1655 = vmatprep.subr.mxu0 0.0
        %1656 = vmatpush1.msra.mxu0 0.0
        %1657 = vmatprep.subr.mxu0 0.0
        %1658 = vmatpush1.msra.mxu0 0.0
        %1659 = vmatprep.subr.mxu0 0.0
        %1660 = vmatpush1.msra.mxu0 0.0
        %1661 = vmatprep.subr.mxu0 0.0
        %1662 = vmatpush1.msra.mxu0 0.0
        %1663 = vmatprep.subr.mxu0 0.0
        %1664 = vmatpush1.msra.mxu0 0.0
        %1665 = vmatprep.subr.mxu0 0.0
        %1666 = vmatpush1.msra.mxu0 0.0
        %1667 = vmatprep.subr.mxu0 0.0
        %1668 = vmatpush1.msra.mxu0 0.0
        %1669 = vmatprep.subr.mxu0 0.0
        %1670 = vmatpush1.msra.mxu0 0.0
        %1671 = vmatprep.subr.mxu0 0.0
        %1672 = vmatpush1.msra.mxu0 0.0
        %1673 = vmatprep.subr.mxu0 0.0
        %1674 = vmatpush1.msra.mxu0 0.0
        %1675 = vmatprep.subr.mxu0 0.0
        %1676 = vmatpush1.msra.mxu0 0.0
        %1677 = vmatprep.subr.mxu0 0.0
        %1678 = vmatpush1.msra.mxu0 0.0
        %1679 = vmatprep.subr.mxu0 0.0
        %1680 = vmatpush1.msra.mxu0 0.0
        %1681 = vmatprep.subr.mxu0 0.0
        %1682 = vmatpush1.msra.mxu0 0.0
        %1683 = vmatprep.subr.mxu0 0.0
        %1684 = vmatpush1.msra.mxu0 0.0
        %1685 = vmatprep.subr.mxu0 0.0
        %1686 = vmatpush1.msra.mxu0 0.0
        %1687 = vmatprep.subr.mxu0 0.0
        %1688 = vmatpush1.msra.mxu0 0.0
        %1689 = vmatprep.subr.mxu0 0.0
        %1690 = vmatpush1.msra.mxu0 0.0
        %1691 = vmatprep.subr.mxu0 0.0
        %1692 = vmatpush1.msra.mxu0 0.0
        %1693 = vmatprep.subr.mxu0 0.0
        %1694 = vmatpush1.msra.mxu0 0.0
        %1695 = vmatprep.subr.mxu0 0.0
        %1696 = vmatpush1.msra.mxu0 0.0
        %1697 = vmatprep.subr.mxu0 0.0
        %1698 = vmatpush1.msra.mxu0 0.0
        %1699 = vmatprep.subr.mxu0 0.0
        %1700 = vmatpush1.msra.mxu0 0.0
        %1701 = vmatprep.subr.mxu0 0.0
        %1702 = vmatpush1.msra.mxu0 0.0
        %1703 = vmatprep.subr.mxu0 0.0
        %1704 = vmatpush1.msra.mxu0 0.0
        %1705 = vmatprep.subr.mxu0 0.0
        %1706 = vmatpush1.msra.mxu0 0.0
        %1707 = vmatprep.subr.mxu0 0.0
        %1708 = vmatpush1.msra.mxu0 0.0
        %1709 = vmatprep.mubr.f32.mxu0 0.0
        %1710 = vmatmul.mubr.f32.gmra.mrb[0].mxu0 %v1643
        %v1711 = vpop.f32.mrb[0].mxu0
        %v1712 = vadd.f32 0.0, %v1711
        %v1713 = vpop.f32.mrb[0].mxu0
        %1714 = vdwg.mxu0
        %v1716 = vsel %vm1467, %v1558, 0
        %1718 = vmatprep.subr.mxu0 0.0
        %1719 = vmatpush1.msra.mxu0 %v386
        %1720 = vmatprep.subr.mxu0 0.0
        %1721 = vmatpush1.msra.mxu0 %v387
        %1722 = vmatprep.subr.mxu0 0.0
        %1723 = vmatpush1.msra.mxu0 0.0
        %1724 = vmatprep.subr.mxu0 0.0
        %1725 = vmatpush1.msra.mxu0 0.0
        %1726 = vmatprep.subr.mxu0 0.0
        %1727 = vmatpush1.msra.mxu0 0.0
        %1728 = vmatprep.subr.mxu0 0.0
        %1729 = vmatpush1.msra.mxu0 0.0
        %1730 = vmatprep.subr.mxu0 0.0
        %1731 = vmatpush1.msra.mxu0 0.0
        %1732 = vmatprep.subr.mxu0 0.0
        %1733 = vmatpush1.msra.mxu0 0.0
        %1734 = vmatprep.subr.mxu0 0.0
        %1735 = vmatpush1.msra.mxu0 0.0
        %1736 = vmatprep.subr.mxu0 0.0
        %1737 = vmatpush1.msra.mxu0 0.0
        %1738 = vmatprep.subr.mxu0 0.0
        %1739 = vmatpush1.msra.mxu0 0.0
        %1740 = vmatprep.subr.mxu0 0.0
        %1741 = vmatpush1.msra.mxu0 0.0
        %1742 = vmatprep.subr.mxu0 0.0
        %1743 = vmatpush1.msra.mxu0 0.0
        %1744 = vmatprep.subr.mxu0 0.0
        %1745 = vmatpush1.msra.mxu0 0.0
        %1746 = vmatprep.subr.mxu0 0.0
        %1747 = vmatpush1.msra.mxu0 0.0
        %1748 = vmatprep.subr.mxu0 0.0
        %1749 = vmatpush1.msra.mxu0 0.0
        %1750 = vmatprep.subr.mxu0 0.0
        %1751 = vmatpush1.msra.mxu0 0.0
        %1752 = vmatprep.subr.mxu0 0.0
        %1753 = vmatpush1.msra.mxu0 0.0
        %1754 = vmatprep.subr.mxu0 0.0
        %1755 = vmatpush1.msra.mxu0 0.0
        %1756 = vmatprep.subr.mxu0 0.0
        %1757 = vmatpush1.msra.mxu0 0.0
        %1758 = vmatprep.subr.mxu0 0.0
        %1759 = vmatpush1.msra.mxu0 0.0
        %1760 = vmatprep.subr.mxu0 0.0
        %1761 = vmatpush1.msra.mxu0 0.0
        %1762 = vmatprep.subr.mxu0 0.0
        %1763 = vmatpush1.msra.mxu0 0.0
        %1764 = vmatprep.subr.mxu0 0.0
        %1765 = vmatpush1.msra.mxu0 0.0
        %1766 = vmatprep.subr.mxu0 0.0
        %1767 = vmatpush1.msra.mxu0 0.0
        %1768 = vmatprep.subr.mxu0 0.0
        %1769 = vmatpush1.msra.mxu0 0.0
        %1770 = vmatprep.subr.mxu0 0.0
        %1771 = vmatpush1.msra.mxu0 0.0
        %1772 = vmatprep.subr.mxu0 0.0
        %1773 = vmatpush1.msra.mxu0 0.0
        %1774 = vmatprep.subr.mxu0 0.0
        %1775 = vmatpush1.msra.mxu0 0.0
        %1776 = vmatprep.subr.mxu0 0.0
        %1777 = vmatpush1.msra.mxu0 0.0
        %1778 = vmatprep.subr.mxu0 0.0
        %1779 = vmatpush1.msra.mxu0 0.0
        %1780 = vmatprep.subr.mxu0 0.0
        %1781 = vmatpush1.msra.mxu0 0.0
        %1782 = vmatprep.mubr.f32.mxu0 0.0
        %1783 = vmatmul.mubr.f32.gmra.mrb[0].mxu0 %v1716
        %v1784 = vpop.f32.mrb[0].mxu0
        %v1785 = vadd.f32 0.0, %v1784
        %v1786 = vpop.f32.mrb[0].mxu0
        %1787 = vdwg.mxu0
        %v1789 = vsel %vm1467, %v1560, 0
        %1791 = vmatprep.subr.mxu0 0.0
        %1792 = vmatpush1.msra.mxu0 %v388
        %1793 = vmatprep.subr.mxu0 0.0
        %1794 = vmatpush1.msra.mxu0 %v389
        %1795 = vmatprep.subr.mxu0 0.0
        %1796 = vmatpush1.msra.mxu0 0.0
        %1797 = vmatprep.subr.mxu0 0.0
        %1798 = vmatpush1.msra.mxu0 0.0
        %1799 = vmatprep.subr.mxu0 0.0
        %1800 = vmatpush1.msra.mxu0 0.0
        %1801 = vmatprep.subr.mxu0 0.0
        %1802 = vmatpush1.msra.mxu0 0.0
        %1803 = vmatprep.subr.mxu0 0.0
        %1804 = vmatpush1.msra.mxu0 0.0
        %1805 = vmatprep.subr.mxu0 0.0
        %1806 = vmatpush1.msra.mxu0 0.0
        %1807 = vmatprep.subr.mxu0 0.0
        %1808 = vmatpush1.msra.mxu0 0.0
        %1809 = vmatprep.subr.mxu0 0.0
        %1810 = vmatpush1.msra.mxu0 0.0
        %1811 = vmatprep.subr.mxu0 0.0
        %1812 = vmatpush1.msra.mxu0 0.0
        %1813 = vmatprep.subr.mxu0 0.0
        %1814 = vmatpush1.msra.mxu0 0.0
        %1815 = vmatprep.subr.mxu0 0.0
        %1816 = vmatpush1.msra.mxu0 0.0
        %1817 = vmatprep.subr.mxu0 0.0
        %1818 = vmatpush1.msra.mxu0 0.0
        %1819 = vmatprep.subr.mxu0 0.0
        %1820 = vmatpush1.msra.mxu0 0.0
        %1821 = vmatprep.subr.mxu0 0.0
        %1822 = vmatpush1.msra.mxu0 0.0
        %1823 = vmatprep.subr.mxu0 0.0
        %1824 = vmatpush1.msra.mxu0 0.0
        %1825 = vmatprep.subr.mxu0 0.0
        %1826 = vmatpush1.msra.mxu0 0.0
        %1827 = vmatprep.subr.mxu0 0.0
        %1828 = vmatpush1.msra.mxu0 0.0
        %1829 = vmatprep.subr.mxu0 0.0
        %1830 = vmatpush1.msra.mxu0 0.0
        %1831 = vmatprep.subr.mxu0 0.0
        %1832 = vmatpush1.msra.mxu0 0.0
        %1833 = vmatprep.subr.mxu0 0.0
        %1834 = vmatpush1.msra.mxu0 0.0
        %1835 = vmatprep.subr.mxu0 0.0
        %1836 = vmatpush1.msra.mxu0 0.0
        %1837 = vmatprep.subr.mxu0 0.0
        %1838 = vmatpush1.msra.mxu0 0.0
        %1839 = vmatprep.subr.mxu0 0.0
        %1840 = vmatpush1.msra.mxu0 0.0
        %1841 = vmatprep.subr.mxu0 0.0
        %1842 = vmatpush1.msra.mxu0 0.0
        %1843 = vmatprep.subr.mxu0 0.0
        %1844 = vmatpush1.msra.mxu0 0.0
        %1845 = vmatprep.subr.mxu0 0.0
        %1846 = vmatpush1.msra.mxu0 0.0
        %1847 = vmatprep.subr.mxu0 0.0
        %1848 = vmatpush1.msra.mxu0 0.0
        %1849 = vmatprep.subr.mxu0 0.0
        %1850 = vmatpush1.msra.mxu0 0.0
        %1851 = vmatprep.subr.mxu0 0.0
        %1852 = vmatpush1.msra.mxu0 0.0
        %1853 = vmatprep.subr.mxu0 0.0
        %1854 = vmatpush1.msra.mxu0 0.0
        %1855 = vmatprep.mubr.f32.mxu0 0.0
        %1856 = vmatmul.mubr.f32.gmra.mrb[0].mxu0 %v1789
        %v1857 = vpop.f32.mrb[0].mxu0
        %v1858 = vadd.f32 0.0, %v1857
        %v1859 = vpop.f32.mrb[0].mxu0
        %1860 = vdwg.mxu0
        %v1862 = vsel %vm1467, %v1562, 0
        %1864 = vmatprep.subr.mxu0 0.0
        %1865 = vmatpush1.msra.mxu0 %v390
        %1866 = vmatprep.subr.mxu0 0.0
        %1867 = vmatpush1.msra.mxu0 %v391
        %1868 = vmatprep.subr.mxu0 0.0
        %1869 = vmatpush1.msra.mxu0 0.0
        %1870 = vmatprep.subr.mxu0 0.0
        %1871 = vmatpush1.msra.mxu0 0.0
        %1872 = vmatprep.subr.mxu0 0.0
        %1873 = vmatpush1.msra.mxu0 0.0
        %1874 = vmatprep.subr.mxu0 0.0
        %1875 = vmatpush1.msra.mxu0 0.0
        %1876 = vmatprep.subr.mxu0 0.0
        %1877 = vmatpush1.msra.mxu0 0.0
        %1878 = vmatprep.subr.mxu0 0.0
        %1879 = vmatpush1.msra.mxu0 0.0
        %1880 = vmatprep.subr.mxu0 0.0
        %1881 = vmatpush1.msra.mxu0 0.0
        %1882 = vmatprep.subr.mxu0 0.0
        %1883 = vmatpush1.msra.mxu0 0.0
        %1884 = vmatprep.subr.mxu0 0.0
        %1885 = vmatpush1.msra.mxu0 0.0
        %1886 = vmatprep.subr.mxu0 0.0
        %1887 = vmatpush1.msra.mxu0 0.0
        %1888 = vmatprep.subr.mxu0 0.0
        %1889 = vmatpush1.msra.mxu0 0.0
        %1890 = vmatprep.subr.mxu0 0.0
        %1891 = vmatpush1.msra.mxu0 0.0
        %1892 = vmatprep.subr.mxu0 0.0
        %1893 = vmatpush1.msra.mxu0 0.0
        %1894 = vmatprep.subr.mxu0 0.0
        %1895 = vmatpush1.msra.mxu0 0.0
        %1896 = vmatprep.subr.mxu0 0.0
        %1897 = vmatpush1.msra.mxu0 0.0
        %1898 = vmatprep.subr.mxu0 0.0
        %1899 = vmatpush1.msra.mxu0 0.0
        %1900 = vmatprep.subr.mxu0 0.0
        %1901 = vmatpush1.msra.mxu0 0.0
        %1902 = vmatprep.subr.mxu0 0.0
        %1903 = vmatpush1.msra.mxu0 0.0
        %1904 = vmatprep.subr.mxu0 0.0
        %1905 = vmatpush1.msra.mxu0 0.0
        %1906 = vmatprep.subr.mxu0 0.0
        %1907 = vmatpush1.msra.mxu0 0.0
        %1908 = vmatprep.subr.mxu0 0.0
        %1909 = vmatpush1.msra.mxu0 0.0
        %1910 = vmatprep.subr.mxu0 0.0
        %1911 = vmatpush1.msra.mxu0 0.0
        %1912 = vmatprep.subr.mxu0 0.0
        %1913 = vmatpush1.msra.mxu0 0.0
        %1914 = vmatprep.subr.mxu0 0.0
        %1915 = vmatpush1.msra.mxu0 0.0
        %1916 = vmatprep.subr.mxu0 0.0
        %1917 = vmatpush1.msra.mxu0 0.0
        %1918 = vmatprep.subr.mxu0 0.0
        %1919 = vmatpush1.msra.mxu0 0.0
        %1920 = vmatprep.subr.mxu0 0.0
        %1921 = vmatpush1.msra.mxu0 0.0
        %1922 = vmatprep.subr.mxu0 0.0
        %1923 = vmatpush1.msra.mxu0 0.0
        %1924 = vmatprep.subr.mxu0 0.0
        %1925 = vmatpush1.msra.mxu0 0.0
        %1926 = vmatprep.subr.mxu0 0.0
        %1927 = vmatpush1.msra.mxu0 0.0
        %1928 = vmatprep.mubr.f32.mxu0 0.0
        %1929 = vmatmul.mubr.f32.gmra.mrb[0].mxu0 %v1862
        %v1930 = vpop.f32.mrb[0].mxu0
        %v1931 = vadd.f32 0.0, %v1930
        %v1932 = vpop.f32.mrb[0].mxu0
        %1933 = vdwg.mxu0
        %v1935 = vsel %vm1467, %v1564, 0
        %1937 = vmatprep.subr.mxu0 0.0
        %1938 = vmatpush1.msra.mxu0 %v392
        %1939 = vmatprep.subr.mxu0 0.0
        %1940 = vmatpush1.msra.mxu0 %v393
        %1941 = vmatprep.subr.mxu0 0.0
        %1942 = vmatpush1.msra.mxu0 0.0
        %1943 = vmatprep.subr.mxu0 0.0
        %1944 = vmatpush1.msra.mxu0 0.0
        %1945 = vmatprep.subr.mxu0 0.0
        %1946 = vmatpush1.msra.mxu0 0.0
        %1947 = vmatprep.subr.mxu0 0.0
        %1948 = vmatpush1.msra.mxu0 0.0
        %1949 = vmatprep.subr.mxu0 0.0
        %1950 = vmatpush1.msra.mxu0 0.0
        %1951 = vmatprep.subr.mxu0 0.0
        %1952 = vmatpush1.msra.mxu0 0.0
        %1953 = vmatprep.subr.mxu0 0.0
        %1954 = vmatpush1.msra.mxu0 0.0
        %1955 = vmatprep.subr.mxu0 0.0
        %1956 = vmatpush1.msra.mxu0 0.0
        %1957 = vmatprep.subr.mxu0 0.0
        %1958 = vmatpush1.msra.mxu0 0.0
        %1959 = vmatprep.subr.mxu0 0.0
        %1960 = vmatpush1.msra.mxu0 0.0
        %1961 = vmatprep.subr.mxu0 0.0
        %1962 = vmatpush1.msra.mxu0 0.0
        %1963 = vmatprep.subr.mxu0 0.0
        %1964 = vmatpush1.msra.mxu0 0.0
        %1965 = vmatprep.subr.mxu0 0.0
        %1966 = vmatpush1.msra.mxu0 0.0
        %1967 = vmatprep.subr.mxu0 0.0
        %1968 = vmatpush1.msra.mxu0 0.0
        %1969 = vmatprep.subr.mxu0 0.0
        %1970 = vmatpush1.msra.mxu0 0.0
        %1971 = vmatprep.subr.mxu0 0.0
        %1972 = vmatpush1.msra.mxu0 0.0
        %1973 = vmatprep.subr.mxu0 0.0
        %1974 = vmatpush1.msra.mxu0 0.0
        %1975 = vmatprep.subr.mxu0 0.0
        %1976 = vmatpush1.msra.mxu0 0.0
        %1977 = vmatprep.subr.mxu0 0.0
        %1978 = vmatpush1.msra.mxu0 0.0
        %1979 = vmatprep.subr.mxu0 0.0
        %1980 = vmatpush1.msra.mxu0 0.0
        %1981 = vmatprep.subr.mxu0 0.0
        %1982 = vmatpush1.msra.mxu0 0.0
        %1983 = vmatprep.subr.mxu0 0.0
        %1984 = vmatpush1.msra.mxu0 0.0
        %1985 = vmatprep.subr.mxu0 0.0
        %1986 = vmatpush1.msra.mxu0 0.0
        %1987 = vmatprep.subr.mxu0 0.0
        %1988 = vmatpush1.msra.mxu0 0.0
        %1989 = vmatprep.subr.mxu0 0.0
        %1990 = vmatpush1.msra.mxu0 0.0
        %1991 = vmatprep.subr.mxu0 0.0
        %1992 = vmatpush1.msra.mxu0 0.0
        %1993 = vmatprep.subr.mxu0 0.0
        %1994 = vmatpush1.msra.mxu0 0.0
        %1995 = vmatprep.subr.mxu0 0.0
        %1996 = vmatpush1.msra.mxu0 0.0
        %1997 = vmatprep.subr.mxu0 0.0
        %1998 = vmatpush1.msra.mxu0 0.0
        %1999 = vmatprep.subr.mxu0 0.0
        %2000 = vmatpush1.msra.mxu0 0.0
        %2001 = vmatprep.mubr.f32.mxu0 0.0
        %2002 = vmatmul.mubr.f32.gmra.mrb[0].mxu0 %v1935
        %v2003 = vpop.f32.mrb[0].mxu0
        %v2004 = vadd.f32 0.0, %v2003
        %v2005 = vpop.f32.mrb[0].mxu0
        %2006 = vdwg.mxu0
        %v2008 = vsel %vm1467, %v1566, 0
        %2010 = vmatprep.subr.mxu0 0.0
        %2011 = vmatpush1.msra.mxu0 %v394
        %2012 = vmatprep.subr.mxu0 0.0
        %2013 = vmatpush1.msra.mxu0 %v395
        %2014 = vmatprep.subr.mxu0 0.0
        %2015 = vmatpush1.msra.mxu0 0.0
        %2016 = vmatprep.subr.mxu0 0.0
        %2017 = vmatpush1.msra.mxu0 0.0
        %2018 = vmatprep.subr.mxu0 0.0
        %2019 = vmatpush1.msra.mxu0 0.0
        %2020 = vmatprep.subr.mxu0 0.0
        %2021 = vmatpush1.msra.mxu0 0.0
        %2022 = vmatprep.subr.mxu0 0.0
        %2023 = vmatpush1.msra.mxu0 0.0
        %2024 = vmatprep.subr.mxu0 0.0
        %2025 = vmatpush1.msra.mxu0 0.0
        %2026 = vmatprep.subr.mxu0 0.0
        %2027 = vmatpush1.msra.mxu0 0.0
        %2028 = vmatprep.subr.mxu0 0.0
        %2029 = vmatpush1.msra.mxu0 0.0
        %2030 = vmatprep.subr.mxu0 0.0
        %2031 = vmatpush1.msra.mxu0 0.0
        %2032 = vmatprep.subr.mxu0 0.0
        %2033 = vmatpush1.msra.mxu0 0.0
        %2034 = vmatprep.subr.mxu0 0.0
        %2035 = vmatpush1.msra.mxu0 0.0
        %2036 = vmatprep.subr.mxu0 0.0
        %2037 = vmatpush1.msra.mxu0 0.0
        %2038 = vmatprep.subr.mxu0 0.0
        %2039 = vmatpush1.msra.mxu0 0.0
        %2040 = vmatprep.subr.mxu0 0.0
        %2041 = vmatpush1.msra.mxu0 0.0
        %2042 = vmatprep.subr.mxu0 0.0
        %2043 = vmatpush1.msra.mxu0 0.0
        %2044 = vmatprep.subr.mxu0 0.0
        %2045 = vmatpush1.msra.mxu0 0.0
        %2046 = vmatprep.subr.mxu0 0.0
        %2047 = vmatpush1.msra.mxu0 0.0
        %2048 = vmatprep.subr.mxu0 0.0
        %2049 = vmatpush1.msra.mxu0 0.0
        %2050 = vmatprep.subr.mxu0 0.0
        %2051 = vmatpush1.msra.mxu0 0.0
        %2052 = vmatprep.subr.mxu0 0.0
        %2053 = vmatpush1.msra.mxu0 0.0
        %2054 = vmatprep.subr.mxu0 0.0
        %2055 = vmatpush1.msra.mxu0 0.0
        %2056 = vmatprep.subr.mxu0 0.0
        %2057 = vmatpush1.msra.mxu0 0.0
        %2058 = vmatprep.subr.mxu0 0.0
        %2059 = vmatpush1.msra.mxu0 0.0
        %2060 = vmatprep.subr.mxu0 0.0
        %2061 = vmatpush1.msra.mxu0 0.0
        %2062 = vmatprep.subr.mxu0 0.0
        %2063 = vmatpush1.msra.mxu0 0.0
        %2064 = vmatprep.subr.mxu0 0.0
        %2065 = vmatpush1.msra.mxu0 0.0
        %2066 = vmatprep.subr.mxu0 0.0
        %2067 = vmatpush1.msra.mxu0 0.0
        %2068 = vmatprep.subr.mxu0 0.0
        %2069 = vmatpush1.msra.mxu0 0.0
        %2070 = vmatprep.subr.mxu0 0.0
        %2071 = vmatpush1.msra.mxu0 0.0
        %2072 = vmatprep.subr.mxu0 0.0
        %2073 = vmatpush1.msra.mxu0 0.0
        %2074 = vmatprep.mubr.f32.mxu0 0.0
        %2075 = vmatmul.mubr.f32.gmra.mrb[0].mxu0 %v2008
        %v2076 = vpop.f32.mrb[0].mxu0
        %v2077 = vadd.f32 0.0, %v2076
        %v2078 = vpop.f32.mrb[0].mxu0
        %2079 = vdwg.mxu0
        %v2081 = vsel %vm1467, %v1568, 0
        %2083 = vmatprep.subr.mxu0 0.0
        %2084 = vmatpush1.msra.mxu0 %v396
        %2085 = vmatprep.subr.mxu0 0.0
        %2086 = vmatpush1.msra.mxu0 %v397
        %2087 = vmatprep.subr.mxu0 0.0
        %2088 = vmatpush1.msra.mxu0 0.0
        %2089 = vmatprep.subr.mxu0 0.0
        %2090 = vmatpush1.msra.mxu0 0.0
        %2091 = vmatprep.subr.mxu0 0.0
        %2092 = vmatpush1.msra.mxu0 0.0
        %2093 = vmatprep.subr.mxu0 0.0
        %2094 = vmatpush1.msra.mxu0 0.0
        %2095 = vmatprep.subr.mxu0 0.0
        %2096 = vmatpush1.msra.mxu0 0.0
        %2097 = vmatprep.subr.mxu0 0.0
        %2098 = vmatpush1.msra.mxu0 0.0
        %2099 = vmatprep.subr.mxu0 0.0
        %2100 = vmatpush1.msra.mxu0 0.0
        %2101 = vmatprep.subr.mxu0 0.0
        %2102 = vmatpush1.msra.mxu0 0.0
        %2103 = vmatprep.subr.mxu0 0.0
        %2104 = vmatpush1.msra.mxu0 0.0
        %2105 = vmatprep.subr.mxu0 0.0
        %2106 = vmatpush1.msra.mxu0 0.0
        %2107 = vmatprep.subr.mxu0 0.0
        %2108 = vmatpush1.msra.mxu0 0.0
        %2109 = vmatprep.subr.mxu0 0.0
        %2110 = vmatpush1.msra.mxu0 0.0
        %2111 = vmatprep.subr.mxu0 0.0
        %2112 = vmatpush1.msra.mxu0 0.0
        %2113 = vmatprep.subr.mxu0 0.0
        %2114 = vmatpush1.msra.mxu0 0.0
        %2115 = vmatprep.subr.mxu0 0.0
        %2116 = vmatpush1.msra.mxu0 0.0
        %2117 = vmatprep.subr.mxu0 0.0
        %2118 = vmatpush1.msra.mxu0 0.0
        %2119 = vmatprep.subr.mxu0 0.0
        %2120 = vmatpush1.msra.mxu0 0.0
        %2121 = vmatprep.subr.mxu0 0.0
        %2122 = vmatpush1.msra.mxu0 0.0
        %2123 = vmatprep.subr.mxu0 0.0
        %2124 = vmatpush1.msra.mxu0 0.0
        %2125 = vmatprep.subr.mxu0 0.0
        %2126 = vmatpush1.msra.mxu0 0.0
        %2127 = vmatprep.subr.mxu0 0.0
        %2128 = vmatpush1.msra.mxu0 0.0
        %2129 = vmatprep.subr.mxu0 0.0
        %2130 = vmatpush1.msra.mxu0 0.0
        %2131 = vmatprep.subr.mxu0 0.0
        %2132 = vmatpush1.msra.mxu0 0.0
        %2133 = vmatprep.subr.mxu0 0.0
        %2134 = vmatpush1.msra.mxu0 0.0
        %2135 = vmatprep.subr.mxu0 0.0
        %2136 = vmatpush1.msra.mxu0 0.0
        %2137 = vmatprep.subr.mxu0 0.0
        %2138 = vmatpush1.msra.mxu0 0.0
        %2139 = vmatprep.subr.mxu0 0.0
        %2140 = vmatpush1.msra.mxu0 0.0
        %2141 = vmatprep.subr.mxu0 0.0
        %2142 = vmatpush1.msra.mxu0 0.0
        %2143 = vmatprep.subr.mxu0 0.0
        %2144 = vmatpush1.msra.mxu0 0.0
        %2145 = vmatprep.subr.mxu0 0.0
        %2146 = vmatpush1.msra.mxu0 0.0
        %2147 = vmatprep.mubr.f32.mxu0 0.0
        %2148 = vmatmul.mubr.f32.gmra.mrb[0].mxu0 %v2081
        %v2149 = vpop.f32.mrb[0].mxu0
        %v2150 = vadd.f32 0.0, %v2149
        %v2151 = vpop.f32.mrb[0].mxu0
        %2152 = vdwg.mxu0
        %v2161 = vrot.slane %v1712, 7
        %v2162 = vsel %vm1446, %v2161, %v1639
        %v2163 = vrot.slane %v1785, 6
        %v2164 = vsel %vm1449, %v2163, %v2162
        %v2165 = vrot.slane %v1858, 5
        %v2166 = vsel %vm1452, %v2165, %v2164
        %v2167 = vrot.slane %v1931, 4
        %v2168 = vsel %vm1455, %v2167, %v2166
        %v2169 = vrot.slane %v2004, 3
        %v2170 = vsel %vm1458, %v2169, %v2168
        %v2171 = vrot.slane %v2077, 2
        %v2172 = vsel %vm1461, %v2171, %v2170
        %v2173 = vrot.slane %v2150, 1
        %v2174 = vsel %vm1464, %v2173, %v2172
        %2176 = vst.msk [vmem:[%s369] sm:$0xff] %vm413, %v2174
        %v2177 = vrot.slane %v1556, 7
        %v2178 = vsel %vm1446, %v2177, %v1554
        %v2179 = vrot.slane %v1558, 6
        %v2180 = vsel %vm1449, %v2179, %v2178
        %v2181 = vrot.slane %v1560, 5
        %v2182 = vsel %vm1452, %v2181, %v2180
        %v2183 = vrot.slane %v1562, 4
        %v2184 = vsel %vm1455, %v2183, %v2182
        %v2185 = vrot.slane %v1564, 3
        %v2186 = vsel %vm1458, %v2185, %v2184
        %v2187 = vrot.slane %v1566, 2
        %v2188 = vsel %vm1461, %v2187, %v2186
        %v2189 = vrot.slane %v1568, 1
        %v2190 = vsel %vm1464, %v2189, %v2188
        %2192 = vst.msk [vmem:[%s376] sm:$0xff] %vm1467, %v2190
        %s2193 = sand.u32 %s217, 1
        %s2194 = scalar_lea.sflag [#allocation5], %s2193
        %s2195 = sand.u32 %s217, 1
        %s2196 = smul.addr %s2195, 8
        %s2197 = scalar_lea.vmem [#allocation6], %s2196
        %s2198 = sand.u32 %s243, 1
        %s2199 = scalar_lea.sflag [#allocation8], %s2198
        %s2200 = sand.u32 %s243, 1
        %s2201 = smul.addr %s2200, 8
        %s2202 = scalar_lea.vmem [#allocation7], %s2201
        // Predicated region
        $region57: #{tpu_custom_call.1} parent=51 // pred_check
          %p2203 = pneg %p227
        $region58: #{tpu_custom_call.1} parent=51 // pred_check_branch
          %2205 = sbr.rel (%p2203) target = $region60
        $region59: #{tpu_custom_call.1} parent=51 // pred_region
          %s2207 = ssub.s32 128, 128
          %2208 = vsyncadd %s2194, %s2207
          %s2209 = smul.addr %s31, 128
          %s2210 = scalar_lea.hbm %s8, %s2209
          %s2212 = sshll.u32 %s2197, 4
          %s2213 = int_to_ptr.vmem [resolvable:$true] %s2212
          %2215 = dma.vmem_to_hbm [thread:$0]  %s2213, 128, %s2210, %s2194
        $region60: #{tpu_custom_call.1} parent=51 // pred_fallthru
          _
        // Predicated region
        $region61: #{tpu_custom_call.1} parent=51 // pred_check
          %p2216 = pneg %p253
        $region62: #{tpu_custom_call.1} parent=51 // pred_check_branch
          %2218 = sbr.rel (%p2216) target = $region64
        $region63: #{tpu_custom_call.1} parent=51 // pred_region
          %s2220 = ssub.s32 128, 128
          %2221 = vsyncadd %s2199, %s2220
          %s2222 = smul.addr %s31, 128
          %s2223 = scalar_lea.hbm %s9, %s2222
          %s2225 = sshll.u32 %s2202, 4
          %s2226 = int_to_ptr.vmem [resolvable:$true] %s2225
          %2228 = dma.vmem_to_hbm [thread:$0]  %s2226, 128, %s2223, %s2199
        $region64: #{tpu_custom_call.1} parent=51 // pred_fallthru
          _
      $region52: #{tpu_custom_call.1} parent=5 // pred_fallthru
        _
      %p2229 = scmp.le.s32.totalorder 2, %s26
      // Predicated region
      $region65: #{tpu_custom_call.1} parent=5 // pred_check
        %p2230 = pneg %p2229
      $region66: #{tpu_custom_call.1} parent=5 // pred_check_branch
        %2232 = sbr.rel (%p2230) target = $region68
      $region67: #{tpu_custom_call.1} parent=5 // pred_region
        %s2233 = ssub.s32 %s26, 2
        // Predicated region
        $region69: #{tpu_custom_call.1} parent=67 // pred_check
          %p2234 = pneg %p233
        $region70: #{tpu_custom_call.1} parent=67 // pred_check_branch
          %2236 = sbr.rel (%p2234) target = $region72
        $region71: #{tpu_custom_call.1} parent=67 // pred_region
          %s2237 = sand.u32 %s218, 1
          %s2238 = scalar_lea.sflag [#allocation5], %s2237
          %s2239 = sand.u32 %s218, 1
          %s2240 = smul.addr %s2239, 8
          %s2241 = scalar_lea.vmem [#allocation6], %s2240
          %2242 = dma.done %s2238, 128
        $region72: #{tpu_custom_call.1} parent=67 // pred_fallthru
          _
        // Predicated region
        $region73: #{tpu_custom_call.1} parent=67 // pred_check
          %p2243 = pneg %p259
        $region74: #{tpu_custom_call.1} parent=67 // pred_check_branch
          %2245 = sbr.rel (%p2243) target = $region76
        $region75: #{tpu_custom_call.1} parent=67 // pred_region
          %s2246 = sand.u32 %s244, 1
          %s2247 = scalar_lea.sflag [#allocation8], %s2246
          %s2248 = sand.u32 %s244, 1
          %s2249 = smul.addr %s2248, 8
          %s2250 = scalar_lea.vmem [#allocation7], %s2249
          %2251 = dma.done %s2247, 128
        $region76: #{tpu_custom_call.1} parent=67 // pred_fallthru
          _
      $region68: #{tpu_custom_call.1} parent=5 // pred_fallthru
        _
    $region6: #{tpu_custom_call.1} parent=1 // loop_footer
      %s30 = sadd.s32 1, %s26
    $region7: #{tpu_custom_call.1} parent=1 // loop_footer_branch
      %25 = sbr.rel target = $region3
    $region8: #{tpu_custom_call.1} parent=1 // loop_exit
      _
    %2252 = vsyncpa [#allocation4], 1
    %s2253 = scalar_lea.sflag [#allocation4], 1
    %2254 = vsyncpa %s2253, 1
    %2255 = vsyncpa [#allocation5], 1
    %s2256 = scalar_lea.sflag [#allocation5], 1
    %2257 = vsyncpa %s2256, 1
    %2258 = vsyncpa [#allocation8], 1
    %s2259 = scalar_lea.sflag [#allocation8], 1
    %2260 = vsyncpa %s2259, 1

</llo_original>
